<compile_context>
chip_gen: v7x
topology: tpu7x:2x2x1
jax: 0.10.0
libtpu: 0.0.40
codegen_flags: <defaults>
</compile_context>

<pallas_src>
import functools

import jax
import jax.numpy as jnp
from jax.experimental import pallas as pl
from jax.experimental.pallas import tpu as pltpu

IN_DIM = 9
HID = 128
OUT_DIM = 9
OUT_PAD = 128          # lane-padded width used only for the in-kernel matmul
MIN_TILE_B = 256
MAX_TILE_B = 1024
NEG_SLOPE = 0.01       # nn.LeakyReLU() default


def _neuro_kernel(x_ref,
                  w0_ref, b0_ref,
                  w1_ref, b1_ref,
                  w2_ref, b2_ref,
                  w3_ref, b3_ref,
                  w4_ref, b4_ref,
                  o_ref,
                  *, use_bf16_act):
    """One (TILE_B, IN_DIM) batch tile -> (TILE_B, OUT_DIM) softmax block."""
    bf16 = jnp.bfloat16

    def act(z_f32):
        # Sigmoid; bf16 on v6e/v7x (2x EUP rate), f32 on v5e.  Result is bf16
        # either way since it feeds the next MXU matmul.
        if use_bf16_act:
            return jax.nn.sigmoid(z_f32.astype(bf16))
        return jax.nn.sigmoid(z_f32).astype(bf16)

    # Layer 0: 9 -> 128.  bf16 operands on the MXU, f32 accumulate + f32 bias.
    x = x_ref[...].astype(bf16)
    h = act(jnp.dot(x, w0_ref[...],
                    preferred_element_type=jnp.float32) + b0_ref[...])

    # Hidden layers 1..3: 128 -> 128.
    h = act(jnp.dot(h, w1_ref[...],
                    preferred_element_type=jnp.float32) + b1_ref[...])
    h = act(jnp.dot(h, w2_ref[...],
                    preferred_element_type=jnp.float32) + b2_ref[...])
    h = act(jnp.dot(h, w3_ref[...],
                    preferred_element_type=jnp.float32) + b3_ref[...])

    # Output projection (weights padded to 128 lanes for the MXU) + LeakyReLU.
    z = jnp.dot(h, w4_ref[...],
                preferred_element_type=jnp.float32) + b4_ref[...]
    z = jnp.where(z >= 0, z, NEG_SLOPE * z)

    # Mask padded lanes so softmax over 128 lanes == softmax over 9 classes.
    col = jax.lax.broadcasted_iota(jnp.int32, z.shape, 1)
    z = jnp.where(col < OUT_DIM, z, jnp.float32(-1e30))

    # Numerically-stable softmax; divide via EUP approx reciprocal.
    z = z - jnp.max(z, axis=-1, keepdims=True)
    e = jnp.exp(z)
    inv = pl.reciprocal(jnp.sum(e, axis=-1, keepdims=True), approx=True)
    probs = e * inv

    # Store only the 9 real classes (small masked store; store slot is idle).
    o_ref[...] = probs[:, :OUT_DIM]


def _const_spec(shape):
    """Full-array block held resident across all grid steps."""
    return pl.BlockSpec(shape, lambda i: (0, 0))


def _round_up(x, m):
    return ((x + m - 1) // m) * m


def _choose_tile_b(batch):
    """Large tiles to amortize per-grid-step overhead, but keep >= 2 grid
    steps when possible so both v7x TensorCores get work."""
    if batch <= MIN_TILE_B:
        return MIN_TILE_B
    return min(MAX_TILE_B, _round_up((batch + 1) // 2, MIN_TILE_B))


def prepare_params(params):
    """One-time preprocessing (hoisted out of the forward path):
    bf16 matmul weights + 128-lane-padded output layer."""
    w0, b0, w1, b1, w2, b2, w3, b3, w4, b4 = params
    bf16 = jnp.bfloat16
    w4p = (jnp.zeros((HID, OUT_PAD), jnp.float32)
           .at[:, :OUT_DIM].set(w4).astype(bf16))
    b4p = jnp.zeros((1, OUT_PAD), jnp.float32).at[:, :OUT_DIM].set(b4)
    return (w0.astype(bf16), b0, w1.astype(bf16), b1,
            w2.astype(bf16), b2, w3.astype(bf16), b3, w4p, b4p)


@functools.partial(jax.jit, static_argnames=("use_bf16_act",))
def neuro_forward(x, prepped_params, use_bf16_act=False):
    """x: (B, 9) float32.  prepped_params: output of prepare_params()."""
    w0, b0, w1, b1, w2, b2, w3, b3, w4p, b4p = prepped_params
    B = x.shape[0]
    tile_b = _choose_tile_b(B)
    num_tiles = pl.cdiv(B, tile_b)
    B_pad = num_tiles * tile_b

    # Zero-pad the batch so every grid step sees well-defined data.
    x_in = x if B_pad == B else jnp.pad(x, ((0, B_pad - B), (0, 0)))

    flops = 2 * B_pad * (IN_DIM * HID + 3 * HID * HID + HID * OUT_PAD)
    transcendentals = B_pad * (4 * HID + OUT_PAD)
    bytes_accessed = (B_pad * IN_DIM * 4 + B_pad * OUT_DIM * 4
                      + (IN_DIM * HID + 3 * HID * HID + HID * OUT_PAD) * 2
                      + 4 * HID * 4 + OUT_PAD * 4)

    grid_spec = pltpu.PrefetchScalarGridSpec(
        num_scalar_prefetch=0,
        grid=(num_tiles,),
        in_specs=[
            pl.BlockSpec((tile_b, IN_DIM), lambda i: (i, 0)),    # x tile
            _const_spec((IN_DIM, HID)), _const_spec((1, HID)),   # layer 0
            _const_spec((HID, HID)),    _const_spec((1, HID)),   # layer 1
            _const_spec((HID, HID)),    _const_spec((1, HID)),   # layer 2
            _const_spec((HID, HID)),    _const_spec((1, HID)),   # layer 3
            _const_spec((HID, OUT_PAD)), _const_spec((1, OUT_PAD)),  # output
        ],
        out_specs=pl.BlockSpec((tile_b, OUT_DIM), lambda i: (i, 0)),
    )

    out = pl.pallas_call(
        functools.partial(_neuro_kernel, use_bf16_act=use_bf16_act),
        out_shape=jax.ShapeDtypeStruct((B_pad, OUT_DIM), jnp.float32),
        grid_spec=grid_spec,
        compiler_params=pltpu.CompilerParams(
            dimension_semantics=("parallel",)),
        cost_estimate=pl.CostEstimate(
            flops=flops,
            transcendentals=transcendentals,
            bytes_accessed=bytes_accessed),
    )(x_in, w0, b0, w1, b1, w2, b2, w3, b3, w4p, b4p)

    return out[:B] if B_pad != B else out


def _detect_bf16_elementwise():
    """bf16 VPU/EUP exists on v6e/v7x; v5e (and older) should stay f32."""
    try:
        kind = jax.devices()[0].device_kind.lower()
    except Exception:
        return False
    if any(tag in kind for tag in ("v2", "v3", "v4", "v5")):
        return False
    if any(tag in kind for tag in ("v6", "v7")):
        return True
    return False


def init_params(key):
    """Mirror the PyTorch module: weights ~ U(-1, 1) (init.uniform_), biases
    keep nn.Linear's default U(-1/sqrt(fan_in), 1/sqrt(fan_in))."""
    dims = [(IN_DIM, HID), (HID, HID), (HID, HID), (HID, HID), (HID, OUT_DIM)]
    params = []
    for (fan_in, fan_out) in dims:
        key, kw, kb = jax.random.split(key, 3)
        w = jax.random.uniform(kw, (fan_in, fan_out), jnp.float32, -1.0, 1.0)
        bound = 1.0 / (fan_in ** 0.5)
        b = jax.random.uniform(kb, (1, fan_out), jnp.float32, -bound, bound)
        params.extend([w, b])
    return tuple(params)


def _reference_forward_f32(x, params):
    """Pure-f32 reference (exact PyTorch semantics)."""
    w0, b0, w1, b1, w2, b2, w3, b3, w4, b4 = params
    h = jax.nn.sigmoid(x @ w0 + b0)
    h = jax.nn.sigmoid(h @ w1 + b1)
    h = jax.nn.sigmoid(h @ w2 + b2)
    h = jax.nn.sigmoid(h @ w3 + b3)
    z = h @ w4 + b4
    z = jnp.where(z >= 0, z, NEG_SLOPE * z)
    return jax.nn.softmax(z, axis=-1)


def _reference_forward_matched(x, params, use_bf16_act):
    """Reference mirroring kernel precision: bf16 matmul operands, f32
    accumulation, and the same (f32 or bf16) activation path."""
    w0, b0, w1, b1, w2, b2, w3, b3, w4, b4 = params
    bf16 = jnp.bfloat16

    def dot(a, w):
        return jnp.dot(a.astype(bf16), w.astype(bf16),
                       preferred_element_type=jnp.float32)

    def act(z):
        if use_bf16_act:
            return jax.nn.sigmoid(z.astype(bf16))
        return jax.nn.sigmoid(z)

    h = act(dot(x, w0) + b0)
    h = act(dot(h, w1) + b1)
    h = act(dot(h, w2) + b2)
    h = act(dot(h, w3) + b3)
    z = dot(h, w4) + b4
    z = jnp.where(z >= 0, z, NEG_SLOPE * z)
    return jax.nn.softmax(z, axis=-1)


# TODO(synk): predict_step / train_ (epsilon-greedy action sampling, Adam
# update) are host-side RL logic, not part of the forward pass; not translated.

if __name__ == "__main__":
    key = jax.random.PRNGKey(0)
    key, kx1, kx2 = jax.random.split(key, 3)

    params = init_params(key)
    prepped = prepare_params(params)           # one-time weight prep (hoisted)
    use_bf16_act = _detect_bf16_elementwise()

    def check(x):
        out = jax.block_until_ready(
            neuro_forward(x, prepped, use_bf16_act=use_bf16_act))
        assert out.shape == (x.shape[0], OUT_DIM)
        # Tight check vs a precision-matched reference.
        ref_m = _reference_forward_matched(x, params, use_bf16_act)
        assert jnp.allclose(out, ref_m, atol=5e-3, rtol=0), \
            "mismatch vs precision-matched reference"
        # Loose sanity check vs the exact f32 PyTorch-equivalent reference.
        ref_f32 = _reference_forward_f32(x, params)
        assert jnp.allclose(out, ref_f32, atol=0.2), "mismatch vs f32 reference"
        # Softmax rows must sum to ~1 (approx reciprocal -> small slack).
        assert jnp.allclose(jnp.sum(out, axis=-1), 1.0, atol=5e-3)
        return out

    # Small batch (single grid step, padded rows sliced off).
    x_small = jax.random.uniform(kx1, (8, IN_DIM), jnp.float32, -1.0, 1.0)
    check(x_small)

    # Larger, non-multiple batch (exercises 2 grid steps + batch padding).
    x_large = jax.random.uniform(kx2, (600, IN_DIM), jnp.float32, -1.0, 1.0)
    check(x_large)

    print("KERNEL_OK")
</pallas_src>

<mosaic_0001>
module attributes {stable_mosaic.version = 11 : i64} {
  func.func @_neuro_kernel(%arg0: i32, %arg1: memref<256x9xf32, #tpu.memory_space<vmem>>, %arg2: memref<9x128xbf16, #tpu.memory_space<vmem>>, %arg3: memref<1x128xf32, #tpu.memory_space<vmem>>, %arg4: memref<128x128xbf16, #tpu.memory_space<vmem>>, %arg5: memref<1x128xf32, #tpu.memory_space<vmem>>, %arg6: memref<128x128xbf16, #tpu.memory_space<vmem>>, %arg7: memref<1x128xf32, #tpu.memory_space<vmem>>, %arg8: memref<128x128xbf16, #tpu.memory_space<vmem>>, %arg9: memref<1x128xf32, #tpu.memory_space<vmem>>, %arg10: memref<128x128xbf16, #tpu.memory_space<vmem>>, %arg11: memref<1x128xf32, #tpu.memory_space<vmem>>, %arg12: memref<256x9xf32, #tpu.memory_space<vmem>>) attributes {dimension_semantics = [#tpu.dimension_semantics<parallel>], iteration_bounds = array<i64: 1>, scalar_prefetch = 0 : i64, scratch_operands = 0 : i64, tpu.core_type = #tpu.core_type<tc>, window_params = [{transform_indices = @transform_0, window_bounds = array<i64: 256, 9>}, {pipeline_mode = #tpu.pipeline_mode<synchronous>, transform_indices = @transform_1, window_bounds = array<i64: 9, 128>}, {pipeline_mode = #tpu.pipeline_mode<synchronous>, transform_indices = @transform_2, window_bounds = array<i64: 1, 128>}, {pipeline_mode = #tpu.pipeline_mode<synchronous>, transform_indices = @transform_3, window_bounds = array<i64: 128, 128>}, {pipeline_mode = #tpu.pipeline_mode<synchronous>, transform_indices = @transform_4, window_bounds = array<i64: 1, 128>}, {pipeline_mode = #tpu.pipeline_mode<synchronous>, transform_indices = @transform_5, window_bounds = array<i64: 128, 128>}, {pipeline_mode = #tpu.pipeline_mode<synchronous>, transform_indices = @transform_6, window_bounds = array<i64: 1, 128>}, {pipeline_mode = #tpu.pipeline_mode<synchronous>, transform_indices = @transform_7, window_bounds = array<i64: 128, 128>}, {pipeline_mode = #tpu.pipeline_mode<synchronous>, transform_indices = @transform_8, window_bounds = array<i64: 1, 128>}, {pipeline_mode = #tpu.pipeline_mode<synchronous>, transform_indices = @transform_9, window_bounds = array<i64: 128, 128>}, {pipeline_mode = #tpu.pipeline_mode<synchronous>, transform_indices = @transform_10, window_bounds = array<i64: 1, 128>}, {transform_indices = @transform_11, window_bounds = array<i64: 256, 9>}]} {
    %c0 = arith.constant 0 : index
    %c0_0 = arith.constant 0 : index
    %0 = vector.load %arg1[%c0, %c0_0] : memref<256x9xf32, #tpu.memory_space<vmem>>, vector<256x9xf32>
    %1 = arith.truncf %0 : vector<256x9xf32> to vector<256x9xbf16>
    %c0_1 = arith.constant 0 : index
    %c0_2 = arith.constant 0 : index
    %2 = vector.load %arg2[%c0_1, %c0_2] : memref<9x128xbf16, #tpu.memory_space<vmem>>, vector<9x128xbf16>
    %cst = arith.constant dense<0.000000e+00> : vector<256x128xf32>
    %3 = tpu.matmul %1, %2, %cst {dimension_numbers = #tpu.dot_dimension_numbers<[1], [0], [0], [1], [0, 0, 1, 1], [], []>} : vector<256x9xbf16>, vector<9x128xbf16>, vector<256x128xf32> -> vector<256x128xf32>
    %c0_3 = arith.constant 0 : index
    %c0_4 = arith.constant 0 : index
    %4 = vector.load %arg3[%c0_3, %c0_4] : memref<1x128xf32, #tpu.memory_space<vmem>>, vector<1x128xf32>
    %5 = vector.broadcast %4 : vector<1x128xf32> to vector<256x128xf32>
    %6 = arith.addf %3, %5 : vector<256x128xf32>
    %7 = arith.negf %6 : vector<256x128xf32>
    %8 = math.exp %7 : vector<256x128xf32>
    %cst_5 = arith.constant 1.000000e+00 : f32
    %9 = vector.broadcast %cst_5 : f32 to vector<256x128xf32>
    %10 = arith.addf %9, %8 : vector<256x128xf32>
    %11 = arith.divf %9, %10 : vector<256x128xf32>
    %12 = arith.truncf %11 : vector<256x128xf32> to vector<256x128xbf16>
    %c0_6 = arith.constant 0 : index
    %c0_7 = arith.constant 0 : index
    %13 = vector.load %arg4[%c0_6, %c0_7] : memref<128x128xbf16, #tpu.memory_space<vmem>>, vector<128x128xbf16>
    %cst_8 = arith.constant dense<0.000000e+00> : vector<256x128xf32>
    %14 = tpu.matmul %12, %13, %cst_8 {dimension_numbers = #tpu.dot_dimension_numbers<[1], [0], [0], [1], [0, 0, 1, 1], [], []>} : vector<256x128xbf16>, vector<128x128xbf16>, vector<256x128xf32> -> vector<256x128xf32>
    %c0_9 = arith.constant 0 : index
    %c0_10 = arith.constant 0 : index
    %15 = vector.load %arg5[%c0_9, %c0_10] : memref<1x128xf32, #tpu.memory_space<vmem>>, vector<1x128xf32>
    %16 = vector.broadcast %15 : vector<1x128xf32> to vector<256x128xf32>
    %17 = arith.addf %14, %16 : vector<256x128xf32>
    %18 = arith.negf %17 : vector<256x128xf32>
    %19 = math.exp %18 : vector<256x128xf32>
    %cst_11 = arith.constant 1.000000e+00 : f32
    %20 = vector.broadcast %cst_11 : f32 to vector<256x128xf32>
    %21 = arith.addf %20, %19 : vector<256x128xf32>
    %22 = arith.divf %20, %21 : vector<256x128xf32>
    %23 = arith.truncf %22 : vector<256x128xf32> to vector<256x128xbf16>
    %c0_12 = arith.constant 0 : index
    %c0_13 = arith.constant 0 : index
    %24 = vector.load %arg6[%c0_12, %c0_13] : memref<128x128xbf16, #tpu.memory_space<vmem>>, vector<128x128xbf16>
    %cst_14 = arith.constant dense<0.000000e+00> : vector<256x128xf32>
    %25 = tpu.matmul %23, %24, %cst_14 {dimension_numbers = #tpu.dot_dimension_numbers<[1], [0], [0], [1], [0, 0, 1, 1], [], []>} : vector<256x128xbf16>, vector<128x128xbf16>, vector<256x128xf32> -> vector<256x128xf32>
    %c0_15 = arith.constant 0 : index
    %c0_16 = arith.constant 0 : index
    %26 = vector.load %arg7[%c0_15, %c0_16] : memref<1x128xf32, #tpu.memory_space<vmem>>, vector<1x128xf32>
    %27 = vector.broadcast %26 : vector<1x128xf32> to vector<256x128xf32>
    %28 = arith.addf %25, %27 : vector<256x128xf32>
    %29 = arith.negf %28 : vector<256x128xf32>
    %30 = math.exp %29 : vector<256x128xf32>
    %cst_17 = arith.constant 1.000000e+00 : f32
    %31 = vector.broadcast %cst_17 : f32 to vector<256x128xf32>
    %32 = arith.addf %31, %30 : vector<256x128xf32>
    %33 = arith.divf %31, %32 : vector<256x128xf32>
    %34 = arith.truncf %33 : vector<256x128xf32> to vector<256x128xbf16>
    %c0_18 = arith.constant 0 : index
    %c0_19 = arith.constant 0 : index
    %35 = vector.load %arg8[%c0_18, %c0_19] : memref<128x128xbf16, #tpu.memory_space<vmem>>, vector<128x128xbf16>
    %cst_20 = arith.constant dense<0.000000e+00> : vector<256x128xf32>
    %36 = tpu.matmul %34, %35, %cst_20 {dimension_numbers = #tpu.dot_dimension_numbers<[1], [0], [0], [1], [0, 0, 1, 1], [], []>} : vector<256x128xbf16>, vector<128x128xbf16>, vector<256x128xf32> -> vector<256x128xf32>
    %c0_21 = arith.constant 0 : index
    %c0_22 = arith.constant 0 : index
    %37 = vector.load %arg9[%c0_21, %c0_22] : memref<1x128xf32, #tpu.memory_space<vmem>>, vector<1x128xf32>
    %38 = vector.broadcast %37 : vector<1x128xf32> to vector<256x128xf32>
    %39 = arith.addf %36, %38 : vector<256x128xf32>
    %40 = arith.negf %39 : vector<256x128xf32>
    %41 = math.exp %40 : vector<256x128xf32>
    %cst_23 = arith.constant 1.000000e+00 : f32
    %42 = vector.broadcast %cst_23 : f32 to vector<256x128xf32>
    %43 = arith.addf %42, %41 : vector<256x128xf32>
    %44 = arith.divf %42, %43 : vector<256x128xf32>
    %45 = arith.truncf %44 : vector<256x128xf32> to vector<256x128xbf16>
    %c0_24 = arith.constant 0 : index
    %c0_25 = arith.constant 0 : index
    %46 = vector.load %arg10[%c0_24, %c0_25] : memref<128x128xbf16, #tpu.memory_space<vmem>>, vector<128x128xbf16>
    %cst_26 = arith.constant dense<0.000000e+00> : vector<256x128xf32>
    %47 = tpu.matmul %45, %46, %cst_26 {dimension_numbers = #tpu.dot_dimension_numbers<[1], [0], [0], [1], [0, 0, 1, 1], [], []>} : vector<256x128xbf16>, vector<128x128xbf16>, vector<256x128xf32> -> vector<256x128xf32>
    %c0_27 = arith.constant 0 : index
    %c0_28 = arith.constant 0 : index
    %48 = vector.load %arg11[%c0_27, %c0_28] : memref<1x128xf32, #tpu.memory_space<vmem>>, vector<1x128xf32>
    %49 = vector.broadcast %48 : vector<1x128xf32> to vector<256x128xf32>
    %50 = arith.addf %47, %49 : vector<256x128xf32>
    %cst_29 = arith.constant 0.000000e+00 : f32
    %51 = vector.broadcast %cst_29 : f32 to vector<256x128xf32>
    %52 = arith.cmpf oge, %50, %51 : vector<256x128xf32>
    %cst_30 = arith.constant 0.00999999977 : f32
    %53 = vector.broadcast %cst_30 : f32 to vector<256x128xf32>
    %54 = arith.mulf %53, %50 : vector<256x128xf32>
    %55 = arith.select %52, %50, %54 : vector<256x128xi1>, vector<256x128xf32>
    %56 = tpu.iota {dimensions = array<i32: 1>} : vector<256x128xi32>
    %c9_i32 = arith.constant 9 : i32
    %57 = vector.broadcast %c9_i32 : i32 to vector<256x128xi32>
    %58 = arith.cmpi slt, %56, %57 : vector<256x128xi32>
    %cst_31 = arith.constant -1.000000e+30 : f32
    %59 = vector.broadcast %cst_31 : f32 to vector<256x128xf32>
    %60 = arith.select %58, %55, %59 : vector<256x128xi1>, vector<256x128xf32>
    %cst_32 = arith.constant dense<0xFF800000> : vector<256xf32>
    %61 = vector.multi_reduction <maximumf>, %60, %cst_32 [1] : vector<256x128xf32> to vector<256xf32>
    %62 = vector.shape_cast %61 : vector<256xf32> to vector<256x1xf32>
    %63 = vector.broadcast %62 : vector<256x1xf32> to vector<256x128xf32>
    %64 = arith.subf %60, %63 : vector<256x128xf32>
    %65 = math.exp %64 : vector<256x128xf32>
    %cst_33 = arith.constant dense<0.000000e+00> : vector<256xf32>
    %66 = vector.multi_reduction <add>, %65, %cst_33 [1] : vector<256x128xf32> to vector<256xf32>
    %67 = vector.shape_cast %66 : vector<256xf32> to vector<256x1xf32>
    %68 = tpu.reciprocal %67 {approx = true} : vector<256x1xf32> -> vector<256x1xf32>
    %69 = vector.broadcast %68 : vector<256x1xf32> to vector<256x128xf32>
    %70 = arith.mulf %65, %69 : vector<256x128xf32>
    %71 = vector.extract_strided_slice %70 {offsets = [0, 0], sizes = [256, 9], strides = [1, 1]} : vector<256x128xf32> to vector<256x9xf32>
    %c0_34 = arith.constant 0 : index
    %c0_35 = arith.constant 0 : index
    %72 = vector.load %arg12[%c0_34, %c0_35] : memref<256x9xf32, #tpu.memory_space<vmem>>, vector<256x9xf32>
    tpu.vector_store %arg12[%c0_34, %c0_35], %71 {strides = array<i32>} : memref<256x9xf32, #tpu.memory_space<vmem>>, vector<256x9xf32>,
    return
  }
  func.func @transform_0(%arg0: i32) -> (i32, i32) {
    %c0_i32 = arith.constant 0 : i32
    %c0_i32_0 = arith.constant 0 : i32
    return %arg0, %c0_i32 : i32, i32
  }
  func.func @transform_1(%arg0: i32) -> (i32, i32) {
    %c0_i32 = arith.constant 0 : i32
    %c0_i32_0 = arith.constant 0 : i32
    %c0_i32_1 = arith.constant 0 : i32
    return %c0_i32, %c0_i32_0 : i32, i32
  }
  func.func @transform_2(%arg0: i32) -> (i32, i32) {
    %c0_i32 = arith.constant 0 : i32
    %c0_i32_0 = arith.constant 0 : i32
    %c0_i32_1 = arith.constant 0 : i32
    return %c0_i32, %c0_i32_0 : i32, i32
  }
  func.func @transform_3(%arg0: i32) -> (i32, i32) {
    %c0_i32 = arith.constant 0 : i32
    %c0_i32_0 = arith.constant 0 : i32
    %c0_i32_1 = arith.constant 0 : i32
    return %c0_i32, %c0_i32_0 : i32, i32
  }
  func.func @transform_4(%arg0: i32) -> (i32, i32) {
    %c0_i32 = arith.constant 0 : i32
    %c0_i32_0 = arith.constant 0 : i32
    %c0_i32_1 = arith.constant 0 : i32
    return %c0_i32, %c0_i32_0 : i32, i32
  }
  func.func @transform_5(%arg0: i32) -> (i32, i32) {
    %c0_i32 = arith.constant 0 : i32
    %c0_i32_0 = arith.constant 0 : i32
    %c0_i32_1 = arith.constant 0 : i32
    return %c0_i32, %c0_i32_0 : i32, i32
  }
  func.func @transform_6(%arg0: i32) -> (i32, i32) {
    %c0_i32 = arith.constant 0 : i32
    %c0_i32_0 = arith.constant 0 : i32
    %c0_i32_1 = arith.constant 0 : i32
    return %c0_i32, %c0_i32_0 : i32, i32
  }
  func.func @transform_7(%arg0: i32) -> (i32, i32) {
    %c0_i32 = arith.constant 0 : i32
    %c0_i32_0 = arith.constant 0 : i32
    %c0_i32_1 = arith.constant 0 : i32
    return %c0_i32, %c0_i32_0 : i32, i32
  }
  func.func @transform_8(%arg0: i32) -> (i32, i32) {
    %c0_i32 = arith.constant 0 : i32
    %c0_i32_0 = arith.constant 0 : i32
    %c0_i32_1 = arith.constant 0 : i32
    return %c0_i32, %c0_i32_0 : i32, i32
  }
  func.func @transform_9(%arg0: i32) -> (i32, i32) {
    %c0_i32 = arith.constant 0 : i32
    %c0_i32_0 = arith.constant 0 : i32
    %c0_i32_1 = arith.constant 0 : i32
    return %c0_i32, %c0_i32_0 : i32, i32
  }
  func.func @transform_10(%arg0: i32) -> (i32, i32) {
    %c0_i32 = arith.constant 0 : i32
    %c0_i32_0 = arith.constant 0 : i32
    %c0_i32_1 = arith.constant 0 : i32
    return %c0_i32, %c0_i32_0 : i32, i32
  }
  func.func @transform_11(%arg0: i32) -> (i32, i32) {
    %c0_i32 = arith.constant 0 : i32
    %c0_i32_0 = arith.constant 0 : i32
    return %arg0, %c0_i32 : i32, i32
  }
}

</mosaic_0001>

<llo_original>
// kernel: neuro_forward.1
$region0: #{neuro_forward.1}
  #allocation0 [shape = 'u32[]', space=smem, size = 0x4, offset = 0x4, fixed_abs, tag = 'smem constant byte address 0x4 - core index']
  #allocation1 [shape = 'u32[144,128]{1,0:T(1,128)}', space=vmem, size = 0x12000, scoped, tag = 'internal scratch']
  %s0 = inlined_call_operand.vmem [shape: f32[256,9], index: 0, kind: input, shape index: {}]
  %s1 = inlined_call_operand.vmem [shape: bf16[9,128], index: 1, kind: input, shape index: {}]
  %s2 = inlined_call_operand.vmem [shape: f32[1,128], index: 2, kind: input, shape index: {}]
  %s3 = inlined_call_operand.vmem [shape: bf16[128,128], index: 3, kind: input, shape index: {}]
  %s4 = inlined_call_operand.vmem [shape: f32[1,128], index: 4, kind: input, shape index: {}]
  %s5 = inlined_call_operand.vmem [shape: bf16[128,128], index: 5, kind: input, shape index: {}]
  %s6 = inlined_call_operand.vmem [shape: f32[1,128], index: 6, kind: input, shape index: {}]
  %s7 = inlined_call_operand.vmem [shape: bf16[128,128], index: 7, kind: input, shape index: {}]
  %s8 = inlined_call_operand.vmem [shape: f32[1,128], index: 8, kind: input, shape index: {}]
  %s9 = inlined_call_operand.vmem [shape: bf16[128,128], index: 9, kind: input, shape index: {}]
  %s10 = inlined_call_operand.vmem [shape: f32[1,128], index: 10, kind: input, shape index: {}]
  %s11 = inlined_call_operand.vmem [shape: f32[256,9], index: 11, kind: output, shape index: {}]
  %s12 = sld [smem:[#allocation0]]
  $region54: #{neuro_forward.1} parent=0
    _
  %s14 = ssub.s32 1, %s12
  %s15 = scalar_select 0, %s14, %s12
  // Predicated region
  $region2: #{neuro_forward.1} parent=0 // pred_check
    _
  $region3: #{neuro_forward.1} parent=0 // pred_check_branch
    %17 = sbr.rel (0) target = $region5
  $region4: #{neuro_forward.1} parent=0 // pred_region
    _
  $region5: #{neuro_forward.1} parent=0 // pred_fallthru
    _
  // Predicated region
  $region6: #{neuro_forward.1} parent=0 // pred_check
    _
  $region7: #{neuro_forward.1} parent=0 // pred_check_branch
    %19 = sbr.rel (0) target = $region9
  $region8: #{neuro_forward.1} parent=0 // pred_region
    _
  $region9: #{neuro_forward.1} parent=0 // pred_fallthru
    _
  // Predicated region
  $region10: #{neuro_forward.1} parent=0 // pred_check
    _
  $region11: #{neuro_forward.1} parent=0 // pred_check_branch
    %21 = sbr.rel (0) target = $region13
  $region12: #{neuro_forward.1} parent=0 // pred_region
    _
  $region13: #{neuro_forward.1} parent=0 // pred_fallthru
    _
  // Predicated region
  $region14: #{neuro_forward.1} parent=0 // pred_check
    _
  $region15: #{neuro_forward.1} parent=0 // pred_check_branch
    %23 = sbr.rel (0) target = $region17
  $region16: #{neuro_forward.1} parent=0 // pred_region
    _
  $region17: #{neuro_forward.1} parent=0 // pred_fallthru
    _
  // Predicated region
  $region18: #{neuro_forward.1} parent=0 // pred_check
    _
  $region19: #{neuro_forward.1} parent=0 // pred_check_branch
    %25 = sbr.rel (0) target = $region21
  $region20: #{neuro_forward.1} parent=0 // pred_region
    _
  $region21: #{neuro_forward.1} parent=0 // pred_fallthru
    _
  // Predicated region
  $region22: #{neuro_forward.1} parent=0 // pred_check
    _
  $region23: #{neuro_forward.1} parent=0 // pred_check_branch
    %27 = sbr.rel (0) target = $region25
  $region24: #{neuro_forward.1} parent=0 // pred_region
    _
  $region25: #{neuro_forward.1} parent=0 // pred_fallthru
    _
  // Predicated region
  $region26: #{neuro_forward.1} parent=0 // pred_check
    _
  $region27: #{neuro_forward.1} parent=0 // pred_check_branch
    %29 = sbr.rel (0) target = $region29
  $region28: #{neuro_forward.1} parent=0 // pred_region
    _
  $region29: #{neuro_forward.1} parent=0 // pred_fallthru
    _
  // Predicated region
  $region30: #{neuro_forward.1} parent=0 // pred_check
    _
  $region31: #{neuro_forward.1} parent=0 // pred_check_branch
    %31 = sbr.rel (0) target = $region33
  $region32: #{neuro_forward.1} parent=0 // pred_region
    _
  $region33: #{neuro_forward.1} parent=0 // pred_fallthru
    _
  // Predicated region
  $region34: #{neuro_forward.1} parent=0 // pred_check
    _
  $region35: #{neuro_forward.1} parent=0 // pred_check_branch
    %33 = sbr.rel (0) target = $region37
  $region36: #{neuro_forward.1} parent=0 // pred_region
    _
  $region37: #{neuro_forward.1} parent=0 // pred_fallthru
    _
  // Predicated region
  $region38: #{neuro_forward.1} parent=0 // pred_check
    _
  $region39: #{neuro_forward.1} parent=0 // pred_check_branch
    %35 = sbr.rel (0) target = $region41
  $region40: #{neuro_forward.1} parent=0 // pred_region
    _
  $region41: #{neuro_forward.1} parent=0 // pred_fallthru
    _
  // Predicated region
  $region42: #{neuro_forward.1} parent=0 // pred_check
    _
  $region43: #{neuro_forward.1} parent=0 // pred_check_branch
    %37 = sbr.rel (0) target = $region45
  $region44: #{neuro_forward.1} parent=0 // pred_region
    _
  $region45: #{neuro_forward.1} parent=0 // pred_fallthru
    _
  %v39 = vld [vmem:[%s0] sm:$0xff]
  %v40 = vld [vmem:[%s0 + $0x8] sm:$0xff]
  %v41 = vld [vmem:[%s0 + $0x10] sm:$0xff]
  %v42 = vld [vmem:[%s0 + $0x18] sm:$0xff]
  %v43 = vld [vmem:[%s0 + $0x20] sm:$0xff]
  %v44 = vld [vmem:[%s0 + $0x28] sm:$0xff]
  %v45 = vld [vmem:[%s0 + $0x30] sm:$0xff]
  %v46 = vld [vmem:[%s0 + $0x38] sm:$0xff]
  %v47 = vld [vmem:[%s0 + $0x40] sm:$0xff]
  %v48 = vld [vmem:[%s0 + $0x48] sm:$0xff]
  %v49 = vld [vmem:[%s0 + $0x50] sm:$0xff]
  %v50 = vld [vmem:[%s0 + $0x58] sm:$0xff]
  %v51 = vld [vmem:[%s0 + $0x60] sm:$0xff]
  %v52 = vld [vmem:[%s0 + $0x68] sm:$0xff]
  %v53 = vld [vmem:[%s0 + $0x70] sm:$0xff]
  %v54 = vld [vmem:[%s0 + $0x78] sm:$0xff]
  %v55 = vld [vmem:[%s0 + $0x80] sm:$0xff]
  %v56 = vld [vmem:[%s0 + $0x88] sm:$0xff]
  %v57 = vld [vmem:[%s0 + $0x90] sm:$0xff]
  %v58 = vld [vmem:[%s0 + $0x98] sm:$0xff]
  %v59 = vld [vmem:[%s0 + $0xa0] sm:$0xff]
  %v60 = vld [vmem:[%s0 + $0xa8] sm:$0xff]
  %v61 = vld [vmem:[%s0 + $0xb0] sm:$0xff]
  %v62 = vld [vmem:[%s0 + $0xb8] sm:$0xff]
  %v63 = vld [vmem:[%s0 + $0xc0] sm:$0xff]
  %v64 = vld [vmem:[%s0 + $0xc8] sm:$0xff]
  %v65 = vld [vmem:[%s0 + $0xd0] sm:$0xff]
  %v66 = vld [vmem:[%s0 + $0xd8] sm:$0xff]
  %v67 = vld [vmem:[%s0 + $0xe0] sm:$0xff]
  %v68 = vld [vmem:[%s0 + $0xe8] sm:$0xff]
  %v69 = vld [vmem:[%s0 + $0xf0] sm:$0xff]
  %v70 = vld [vmem:[%s0 + $0xf8] sm:$0xff]
  %v71 = vpack.c.bf16 %v40, %v39
  %v72 = vpack.c.bf16 %v42, %v41
  %v73 = vpack.c.bf16 %v44, %v43
  %v74 = vpack.c.bf16 %v46, %v45
  %v75 = vpack.c.bf16 %v48, %v47
  %v76 = vpack.c.bf16 %v50, %v49
  %v77 = vpack.c.bf16 %v52, %v51
  %v78 = vpack.c.bf16 %v54, %v53
  %v79 = vpack.c.bf16 %v56, %v55
  %v80 = vpack.c.bf16 %v58, %v57
  %v81 = vpack.c.bf16 %v60, %v59
  %v82 = vpack.c.bf16 %v62, %v61
  %v83 = vpack.c.bf16 %v64, %v63
  %v84 = vpack.c.bf16 %v66, %v65
  %v85 = vpack.c.bf16 %v68, %v67
  %v86 = vpack.c.bf16 %v70, %v69
  %v87 = vld [vmem:[%s1] sm:$0xf]
  %v88 = vld [vmem:[%s1 + $0x4] sm:$0x1]
  %v89 = vld [vmem:[%s2] sm:$0x1]
  %v91 = vlaneseq
  %v92 = vshrl.u32 %v91, 7
  %v93 = vsub.s32 0, %v92
  %v94 = vrot.slane %v89, %v93
  %v98 = vunpack.c.l.b16 %v87
  %v99 = vunpack.c.l.b16 %v88
  %v100 = vpack.c.b16 %v99, %v98
  %vm101 = vcmask 72704
  %v103 = vsel %vm101, %v71, 0
  %v106 = vsel %vm101, %v72, 0
  %v109 = vsel %vm101, %v73, 0
  %v112 = vsel %vm101, %v74, 0
  %v115 = vsel %vm101, %v75, 0
  %v118 = vsel %vm101, %v76, 0
  %v121 = vsel %vm101, %v77, 0
  %v124 = vsel %vm101, %v78, 0
  %v127 = vsel %vm101, %v79, 0
  %v130 = vsel %vm101, %v80, 0
  %v133 = vsel %vm101, %v81, 0
  %v136 = vsel %vm101, %v82, 0
  %v139 = vsel %vm101, %v83, 0
  %v142 = vsel %vm101, %v84, 0
  %v145 = vsel %vm101, %v85, 0
  %v148 = vsel %vm101, %v86, 0
  %vm150 = vcmask 1043456
  %vm151 = vcmask 1044480
  %v152 = vsel %vm150, 4294967295, 65535
  %v153 = vsel %vm151, %v152, 0
  %v155 = vand.u32 %v100, %v153
  %157 = vmatprep.subr.bf16.mxu0 0
  %158 = vmatpush1.bf16.msra.mxu0 %v155
  %159 = vmatprep.subr.bf16.mxu0 0
  %160 = vmatpush1.bf16.msra.mxu0 0
  %161 = vmatprep.subr.bf16.mxu0 0
  %162 = vmatpush1.bf16.msra.mxu0 0
  %163 = vmatprep.subr.bf16.mxu0 0
  %164 = vmatpush1.bf16.msra.mxu0 0
  %165 = vmatprep.subr.bf16.mxu0 0
  %166 = vmatpush1.bf16.msra.mxu0 0
  %167 = vmatprep.subr.bf16.mxu0 0
  %168 = vmatpush1.bf16.msra.mxu0 0
  %169 = vmatprep.subr.bf16.mxu0 0
  %170 = vmatpush1.bf16.msra.mxu0 0
  %171 = vmatprep.subr.bf16.mxu0 0
  %172 = vmatpush1.bf16.msra.mxu0 0
  %173 = vmatprep.subr.bf16.mxu0 0
  %174 = vmatpush1.bf16.msra.mxu0 0
  %175 = vmatprep.subr.bf16.mxu0 0
  %176 = vmatpush1.bf16.msra.mxu0 0
  %177 = vmatprep.subr.bf16.mxu0 0
  %178 = vmatpush1.bf16.msra.mxu0 0
  %179 = vmatprep.subr.bf16.mxu0 0
  %180 = vmatpush1.bf16.msra.mxu0 0
  %181 = vmatprep.subr.bf16.mxu0 0
  %182 = vmatpush1.bf16.msra.mxu0 0
  %183 = vmatprep.subr.bf16.mxu0 0
  %184 = vmatpush1.bf16.msra.mxu0 0
  %185 = vmatprep.subr.bf16.mxu0 0
  %186 = vmatpush1.bf16.msra.mxu0 0
  %187 = vmatprep.subr.bf16.mxu0 0
  %188 = vmatpush1.bf16.msra.mxu0 0
  %189 = vmatprep.mubr.bf16.mxu0 0
  %190 = vmatmul.mubr.bf16.gmra.mrb[0].mxu0 %v103
  %v191 = vpop.f32.mrb[0].mxu0
  %v192 = vadd.f32 %v94, %v191
  %v193 = vpop.f32.mrb[0].mxu0
  %v194 = vpop.f32.mrb[0].mxu0
  %v195 = vadd.f32 %v94, %v194
  %v196 = vpop.f32.mrb[0].mxu0
  %197 = vmatprep.mubr.bf16.mxu0 0
  %198 = vmatmul.mubr.bf16.gmra.mrb[0].mxu0 %v106
  %v199 = vpop.f32.mrb[0].mxu0
  %v200 = vadd.f32 %v94, %v199
  %v201 = vpop.f32.mrb[0].mxu0
  %v202 = vpop.f32.mrb[0].mxu0
  %v203 = vadd.f32 %v94, %v202
  %v204 = vpop.f32.mrb[0].mxu0
  %205 = vmatprep.mubr.bf16.mxu0 0
  %206 = vmatmul.mubr.bf16.gmra.mrb[0].mxu0 %v109
  %v207 = vpop.f32.mrb[0].mxu0
  %v208 = vadd.f32 %v94, %v207
  %v209 = vpop.f32.mrb[0].mxu0
  %v210 = vpop.f32.mrb[0].mxu0
  %v211 = vadd.f32 %v94, %v210
  %v212 = vpop.f32.mrb[0].mxu0
  %213 = vmatprep.mubr.bf16.mxu0 0
  %214 = vmatmul.mubr.bf16.gmra.mrb[0].mxu0 %v112
  %v215 = vpop.f32.mrb[0].mxu0
  %v216 = vadd.f32 %v94, %v215
  %v217 = vpop.f32.mrb[0].mxu0
  %v218 = vpop.f32.mrb[0].mxu0
  %v219 = vadd.f32 %v94, %v218
  %v220 = vpop.f32.mrb[0].mxu0
  %221 = vmatprep.mubr.bf16.mxu0 0
  %222 = vmatmul.mubr.bf16.gmra.mrb[0].mxu0 %v115
  %v223 = vpop.f32.mrb[0].mxu0
  %v224 = vadd.f32 %v94, %v223
  %v225 = vpop.f32.mrb[0].mxu0
  %v226 = vpop.f32.mrb[0].mxu0
  %v227 = vadd.f32 %v94, %v226
  %v228 = vpop.f32.mrb[0].mxu0
  %229 = vmatprep.mubr.bf16.mxu0 0
  %230 = vmatmul.mubr.bf16.gmra.mrb[0].mxu0 %v118
  %v231 = vpop.f32.mrb[0].mxu0
  %v232 = vadd.f32 %v94, %v231
  %v233 = vpop.f32.mrb[0].mxu0
  %v234 = vpop.f32.mrb[0].mxu0
  %v235 = vadd.f32 %v94, %v234
  %v236 = vpop.f32.mrb[0].mxu0
  %237 = vmatprep.mubr.bf16.mxu0 0
  %238 = vmatmul.mubr.bf16.gmra.mrb[0].mxu0 %v121
  %v239 = vpop.f32.mrb[0].mxu0
  %v240 = vadd.f32 %v94, %v239
  %v241 = vpop.f32.mrb[0].mxu0
  %v242 = vpop.f32.mrb[0].mxu0
  %v243 = vadd.f32 %v94, %v242
  %v244 = vpop.f32.mrb[0].mxu0
  %245 = vmatprep.mubr.bf16.mxu0 0
  %246 = vmatmul.mubr.bf16.gmra.mrb[0].mxu0 %v124
  %v247 = vpop.f32.mrb[0].mxu0
  %v248 = vadd.f32 %v94, %v247
  %v249 = vpop.f32.mrb[0].mxu0
  %v250 = vpop.f32.mrb[0].mxu0
  %v251 = vadd.f32 %v94, %v250
  %v252 = vpop.f32.mrb[0].mxu0
  %253 = vmatprep.mubr.bf16.mxu0 0
  %254 = vmatmul.mubr.bf16.gmra.mrb[0].mxu0 %v127
  %v255 = vpop.f32.mrb[0].mxu0
  %v256 = vadd.f32 %v94, %v255
  %v257 = vpop.f32.mrb[0].mxu0
  %v258 = vpop.f32.mrb[0].mxu0
  %v259 = vadd.f32 %v94, %v258
  %v260 = vpop.f32.mrb[0].mxu0
  %261 = vmatprep.mubr.bf16.mxu0 0
  %262 = vmatmul.mubr.bf16.gmra.mrb[0].mxu0 %v130
  %v263 = vpop.f32.mrb[0].mxu0
  %v264 = vadd.f32 %v94, %v263
  %v265 = vpop.f32.mrb[0].mxu0
  %v266 = vpop.f32.mrb[0].mxu0
  %v267 = vadd.f32 %v94, %v266
  %v268 = vpop.f32.mrb[0].mxu0
  %269 = vmatprep.mubr.bf16.mxu0 0
  %270 = vmatmul.mubr.bf16.gmra.mrb[0].mxu0 %v133
  %v271 = vpop.f32.mrb[0].mxu0
  %v272 = vadd.f32 %v94, %v271
  %v273 = vpop.f32.mrb[0].mxu0
  %v274 = vpop.f32.mrb[0].mxu0
  %v275 = vadd.f32 %v94, %v274
  %v276 = vpop.f32.mrb[0].mxu0
  %277 = vmatprep.mubr.bf16.mxu0 0
  %278 = vmatmul.mubr.bf16.gmra.mrb[0].mxu0 %v136
  %v279 = vpop.f32.mrb[0].mxu0
  %v280 = vadd.f32 %v94, %v279
  %v281 = vpop.f32.mrb[0].mxu0
  %v282 = vpop.f32.mrb[0].mxu0
  %v283 = vadd.f32 %v94, %v282
  %v284 = vpop.f32.mrb[0].mxu0
  %285 = vmatprep.mubr.bf16.mxu0 0
  %286 = vmatmul.mubr.bf16.gmra.mrb[0].mxu0 %v139
  %v287 = vpop.f32.mrb[0].mxu0
  %v288 = vadd.f32 %v94, %v287
  %v289 = vpop.f32.mrb[0].mxu0
  %v290 = vpop.f32.mrb[0].mxu0
  %v291 = vadd.f32 %v94, %v290
  %v292 = vpop.f32.mrb[0].mxu0
  %293 = vmatprep.mubr.bf16.mxu0 0
  %294 = vmatmul.mubr.bf16.gmra.mrb[0].mxu0 %v142
  %v295 = vpop.f32.mrb[0].mxu0
  %v296 = vadd.f32 %v94, %v295
  %v297 = vpop.f32.mrb[0].mxu0
  %v298 = vpop.f32.mrb[0].mxu0
  %v299 = vadd.f32 %v94, %v298
  %v300 = vpop.f32.mrb[0].mxu0
  %301 = vmatprep.mubr.bf16.mxu0 0
  %302 = vmatmul.mubr.bf16.gmra.mrb[0].mxu0 %v145
  %v303 = vpop.f32.mrb[0].mxu0
  %v304 = vadd.f32 %v94, %v303
  %v305 = vpop.f32.mrb[0].mxu0
  %v306 = vpop.f32.mrb[0].mxu0
  %v307 = vadd.f32 %v94, %v306
  %v308 = vpop.f32.mrb[0].mxu0
  %309 = vmatprep.mubr.bf16.mxu0 0
  %310 = vmatmul.mubr.bf16.gmra.mrb[0].mxu0 %v148
  %v311 = vpop.f32.mrb[0].mxu0
  %v312 = vadd.f32 %v94, %v311
  %v313 = vpop.f32.mrb[0].mxu0
  %v314 = vpop.f32.mrb[0].mxu0
  %v315 = vadd.f32 %v94, %v314
  %v316 = vpop.f32.mrb[0].mxu0
  %317 = vdwg.mxu0
  %v318 = vxor.u32 %v192, 2147483648
  %v319 = vxor.u32 %v195, 2147483648
  %v320 = vxor.u32 %v200, 2147483648
  %v321 = vxor.u32 %v203, 2147483648
  %v322 = vxor.u32 %v208, 2147483648
  %v323 = vxor.u32 %v211, 2147483648
  %v324 = vxor.u32 %v216, 2147483648
  %v325 = vxor.u32 %v219, 2147483648
  %v326 = vxor.u32 %v224, 2147483648
  %v327 = vxor.u32 %v227, 2147483648
  %v328 = vxor.u32 %v232, 2147483648
  %v329 = vxor.u32 %v235, 2147483648
  %v330 = vxor.u32 %v240, 2147483648
  %v331 = vxor.u32 %v243, 2147483648
  %v332 = vxor.u32 %v248, 2147483648
  %v333 = vxor.u32 %v251, 2147483648
  %v334 = vxor.u32 %v256, 2147483648
  %v335 = vxor.u32 %v259, 2147483648
  %v336 = vxor.u32 %v264, 2147483648
  %v337 = vxor.u32 %v267, 2147483648
  %v338 = vxor.u32 %v272, 2147483648
  %v339 = vxor.u32 %v275, 2147483648
  %v340 = vxor.u32 %v280, 2147483648
  %v341 = vxor.u32 %v283, 2147483648
  %v342 = vxor.u32 %v288, 2147483648
  %v343 = vxor.u32 %v291, 2147483648
  %v344 = vxor.u32 %v296, 2147483648
  %v345 = vxor.u32 %v299, 2147483648
  %v346 = vxor.u32 %v304, 2147483648
  %v347 = vxor.u32 %v307, 2147483648
  %v348 = vxor.u32 %v312, 2147483648
  %v349 = vxor.u32 %v315, 2147483648
  %v350 = vmul.f32 %v318, 1.442695
  %v351 = vpow.pop %v350
  %v352 = vmul.f32 %v319, 1.442695
  %v353 = vpow.pop %v352
  %v354 = vmul.f32 %v320, 1.442695
  %v355 = vpow.pop %v354
  %v356 = vmul.f32 %v321, 1.442695
  %v357 = vpow.pop %v356
  %v358 = vmul.f32 %v322, 1.442695
  %v359 = vpow.pop %v358
  %v360 = vmul.f32 %v323, 1.442695
  %v361 = vpow.pop %v360
  %v362 = vmul.f32 %v324, 1.442695
  %v363 = vpow.pop %v362
  %v364 = vmul.f32 %v325, 1.442695
  %v365 = vpow.pop %v364
  %v366 = vmul.f32 %v326, 1.442695
  %v367 = vpow.pop %v366
  %v368 = vmul.f32 %v327, 1.442695
  %v369 = vpow.pop %v368
  %v370 = vmul.f32 %v328, 1.442695
  %v371 = vpow.pop %v370
  %v372 = vmul.f32 %v329, 1.442695
  %v373 = vpow.pop %v372
  %v374 = vmul.f32 %v330, 1.442695
  %v375 = vpow.pop %v374
  %v376 = vmul.f32 %v331, 1.442695
  %v377 = vpow.pop %v376
  %v378 = vmul.f32 %v332, 1.442695
  %v379 = vpow.pop %v378
  %v380 = vmul.f32 %v333, 1.442695
  %v381 = vpow.pop %v380
  %v382 = vmul.f32 %v334, 1.442695
  %v383 = vpow.pop %v382
  %v384 = vmul.f32 %v335, 1.442695
  %v385 = vpow.pop %v384
  %v386 = vmul.f32 %v336, 1.442695
  %v387 = vpow.pop %v386
  %v388 = vmul.f32 %v337, 1.442695
  %v389 = vpow.pop %v388
  %v390 = vmul.f32 %v338, 1.442695
  %v391 = vpow.pop %v390
  %v392 = vmul.f32 %v339, 1.442695
  %v393 = vpow.pop %v392
  %v394 = vmul.f32 %v340, 1.442695
  %v395 = vpow.pop %v394
  %v396 = vmul.f32 %v341, 1.442695
  %v397 = vpow.pop %v396
  %v398 = vmul.f32 %v342, 1.442695
  %v399 = vpow.pop %v398
  %v400 = vmul.f32 %v343, 1.442695
  %v401 = vpow.pop %v400
  %v402 = vmul.f32 %v344, 1.442695
  %v403 = vpow.pop %v402
  %v404 = vmul.f32 %v345, 1.442695
  %v405 = vpow.pop %v404
  %v406 = vmul.f32 %v346, 1.442695
  %v407 = vpow.pop %v406
  %v408 = vmul.f32 %v347, 1.442695
  %v409 = vpow.pop %v408
  %v410 = vmul.f32 %v348, 1.442695
  %v411 = vpow.pop %v410
  %v412 = vmul.f32 %v349, 1.442695
  %v413 = vpow.pop %v412
  %v414 = vadd.f32 %v351, 1.0
  %v415 = vadd.f32 %v353, 1.0
  %v416 = vadd.f32 %v355, 1.0
  %v417 = vadd.f32 %v357, 1.0
  %v418 = vadd.f32 %v359, 1.0
  %v419 = vadd.f32 %v361, 1.0
  %v420 = vadd.f32 %v363, 1.0
  %v421 = vadd.f32 %v365, 1.0
  %v422 = vadd.f32 %v367, 1.0
  %v423 = vadd.f32 %v369, 1.0
  %v424 = vadd.f32 %v371, 1.0
  %v425 = vadd.f32 %v373, 1.0
  %v426 = vadd.f32 %v375, 1.0
  %v427 = vadd.f32 %v377, 1.0
  %v428 = vadd.f32 %v379, 1.0
  %v429 = vadd.f32 %v381, 1.0
  %v430 = vadd.f32 %v383, 1.0
  %v431 = vadd.f32 %v385, 1.0
  %v432 = vadd.f32 %v387, 1.0
  %v433 = vadd.f32 %v389, 1.0
  %v434 = vadd.f32 %v391, 1.0
  %v435 = vadd.f32 %v393, 1.0
  %v436 = vadd.f32 %v395, 1.0
  %v437 = vadd.f32 %v397, 1.0
  %v438 = vadd.f32 %v399, 1.0
  %v439 = vadd.f32 %v401, 1.0
  %v440 = vadd.f32 %v403, 1.0
  %v441 = vadd.f32 %v405, 1.0
  %v442 = vadd.f32 %v407, 1.0
  %v443 = vadd.f32 %v409, 1.0
  %v444 = vadd.f32 %v411, 1.0
  %v445 = vadd.f32 %v413, 1.0
  %v446 = vrcp.pop %v414
  %v447 = vmul.f32 1.0, %v446
  %v448 = vrcp.pop %v415
  %v449 = vmul.f32 1.0, %v448
  %v450 = vrcp.pop %v416
  %v451 = vmul.f32 1.0, %v450
  %v452 = vrcp.pop %v417
  %v453 = vmul.f32 1.0, %v452
  %v454 = vrcp.pop %v418
  %v455 = vmul.f32 1.0, %v454
  %v456 = vrcp.pop %v419
  %v457 = vmul.f32 1.0, %v456
  %v458 = vrcp.pop %v420
  %v459 = vmul.f32 1.0, %v458
  %v460 = vrcp.pop %v421
  %v461 = vmul.f32 1.0, %v460
  %v462 = vrcp.pop %v422
  %v463 = vmul.f32 1.0, %v462
  %v464 = vrcp.pop %v423
  %v465 = vmul.f32 1.0, %v464
  %v466 = vrcp.pop %v424
  %v467 = vmul.f32 1.0, %v466
  %v468 = vrcp.pop %v425
  %v469 = vmul.f32 1.0, %v468
  %v470 = vrcp.pop %v426
  %v471 = vmul.f32 1.0, %v470
  %v472 = vrcp.pop %v427
  %v473 = vmul.f32 1.0, %v472
  %v474 = vrcp.pop %v428
  %v475 = vmul.f32 1.0, %v474
  %v476 = vrcp.pop %v429
  %v477 = vmul.f32 1.0, %v476
  %v478 = vrcp.pop %v430
  %v479 = vmul.f32 1.0, %v478
  %v480 = vrcp.pop %v431
  %v481 = vmul.f32 1.0, %v480
  %v482 = vrcp.pop %v432
  %v483 = vmul.f32 1.0, %v482
  %v484 = vrcp.pop %v433
  %v485 = vmul.f32 1.0, %v484
  %v486 = vrcp.pop %v434
  %v487 = vmul.f32 1.0, %v486
  %v488 = vrcp.pop %v435
  %v489 = vmul.f32 1.0, %v488
  %v490 = vrcp.pop %v436
  %v491 = vmul.f32 1.0, %v490
  %v492 = vrcp.pop %v437
  %v493 = vmul.f32 1.0, %v492
  %v494 = vrcp.pop %v438
  %v495 = vmul.f32 1.0, %v494
  %v496 = vrcp.pop %v439
  %v497 = vmul.f32 1.0, %v496
  %v498 = vrcp.pop %v440
  %v499 = vmul.f32 1.0, %v498
  %v500 = vrcp.pop %v441
  %v501 = vmul.f32 1.0, %v500
  %v502 = vrcp.pop %v442
  %v503 = vmul.f32 1.0, %v502
  %v504 = vrcp.pop %v443
  %v505 = vmul.f32 1.0, %v504
  %v506 = vrcp.pop %v444
  %v507 = vmul.f32 1.0, %v506
  %v508 = vrcp.pop %v445
  %v509 = vmul.f32 1.0, %v508
  %v510 = vpack.c.bf16 %v449, %v447
  %v511 = vpack.c.bf16 %v453, %v451
  %v512 = vpack.c.bf16 %v457, %v455
  %v513 = vpack.c.bf16 %v461, %v459
  %v514 = vpack.c.bf16 %v465, %v463
  %v515 = vpack.c.bf16 %v469, %v467
  %v516 = vpack.c.bf16 %v473, %v471
  %v517 = vpack.c.bf16 %v477, %v475
  %v518 = vpack.c.bf16 %v481, %v479
  %v519 = vpack.c.bf16 %v485, %v483
  %v520 = vpack.c.bf16 %v489, %v487
  %v521 = vpack.c.bf16 %v493, %v491
  %v522 = vpack.c.bf16 %v497, %v495
  %v523 = vpack.c.bf16 %v501, %v499
  %v524 = vpack.c.bf16 %v505, %v503
  %v525 = vpack.c.bf16 %v509, %v507
  %v526 = vld [vmem:[%s3] sm:$0xf]
  %v527 = vld [vmem:[%s3 + $0x4] sm:$0xf]
  %v528 = vld [vmem:[%s3 + $0x8] sm:$0xf]
  %v529 = vld [vmem:[%s3 + $0xc] sm:$0xf]
  %v530 = vld [vmem:[%s3 + $0x10] sm:$0xf]
  %v531 = vld [vmem:[%s3 + $0x14] sm:$0xf]
  %v532 = vld [vmem:[%s3 + $0x18] sm:$0xf]
  %v533 = vld [vmem:[%s3 + $0x1c] sm:$0xf]
  %v534 = vld [vmem:[%s3 + $0x20] sm:$0xf]
  %v535 = vld [vmem:[%s3 + $0x24] sm:$0xf]
  %v536 = vld [vmem:[%s3 + $0x28] sm:$0xf]
  %v537 = vld [vmem:[%s3 + $0x2c] sm:$0xf]
  %v538 = vld [vmem:[%s3 + $0x30] sm:$0xf]
  %v539 = vld [vmem:[%s3 + $0x34] sm:$0xf]
  %v540 = vld [vmem:[%s3 + $0x38] sm:$0xf]
  %v541 = vld [vmem:[%s3 + $0x3c] sm:$0xf]
  %v542 = vld [vmem:[%s4] sm:$0x1]
  %v544 = vlaneseq
  %v545 = vshrl.u32 %v544, 7
  %v546 = vsub.s32 0, %v545
  %v547 = vrot.slane %v542, %v546
  %v565 = vunpack.c.l.b16 %v526
  %v566 = vunpack.c.l.b16 %v527
  %v567 = vunpack.c.l.b16 %v528
  %v568 = vunpack.c.l.b16 %v529
  %v569 = vunpack.c.l.b16 %v530
  %v570 = vunpack.c.l.b16 %v531
  %v571 = vunpack.c.l.b16 %v532
  %v572 = vunpack.c.l.b16 %v533
  %v573 = vunpack.c.l.b16 %v534
  %v574 = vunpack.c.l.b16 %v535
  %v575 = vunpack.c.l.b16 %v536
  %v576 = vunpack.c.l.b16 %v537
  %v577 = vunpack.c.l.b16 %v538
  %v578 = vunpack.c.l.b16 %v539
  %v579 = vunpack.c.l.b16 %v540
  %v580 = vunpack.c.l.b16 %v541
  %v581 = vpack.c.b16 %v566, %v565
  %v582 = vpack.c.b16 %v568, %v567
  %v583 = vpack.c.b16 %v570, %v569
  %v584 = vpack.c.b16 %v572, %v571
  %v585 = vpack.c.b16 %v574, %v573
  %v586 = vpack.c.b16 %v576, %v575
  %v587 = vpack.c.b16 %v578, %v577
  %v588 = vpack.c.b16 %v580, %v579
  %597 = vmatprep.subr.bf16.mxu0 0
  %598 = vmatpush1.bf16.msra.mxu0 %v581
  %599 = vmatprep.subr.bf16.mxu0 0
  %600 = vmatpush1.bf16.msra.mxu0 %v582
  %601 = vmatprep.subr.bf16.mxu0 0
  %602 = vmatpush1.bf16.msra.mxu0 %v583
  %603 = vmatprep.subr.bf16.mxu0 0
  %604 = vmatpush1.bf16.msra.mxu0 %v584
  %605 = vmatprep.subr.bf16.mxu0 0
  %606 = vmatpush1.bf16.msra.mxu0 %v585
  %607 = vmatprep.subr.bf16.mxu0 0
  %608 = vmatpush1.bf16.msra.mxu0 %v586
  %609 = vmatprep.subr.bf16.mxu0 0
  %610 = vmatpush1.bf16.msra.mxu0 %v587
  %611 = vmatprep.subr.bf16.mxu0 0
  %612 = vmatpush1.bf16.msra.mxu0 %v588
  %613 = vmatprep.subr.bf16.mxu0 0
  %614 = vmatpush1.bf16.msra.mxu0 0
  %615 = vmatprep.subr.bf16.mxu0 0
  %616 = vmatpush1.bf16.msra.mxu0 0
  %617 = vmatprep.subr.bf16.mxu0 0
  %618 = vmatpush1.bf16.msra.mxu0 0
  %619 = vmatprep.subr.bf16.mxu0 0
  %620 = vmatpush1.bf16.msra.mxu0 0
  %621 = vmatprep.subr.bf16.mxu0 0
  %622 = vmatpush1.bf16.msra.mxu0 0
  %623 = vmatprep.subr.bf16.mxu0 0
  %624 = vmatpush1.bf16.msra.mxu0 0
  %625 = vmatprep.subr.bf16.mxu0 0
  %626 = vmatpush1.bf16.msra.mxu0 0
  %627 = vmatprep.subr.bf16.mxu0 0
  %628 = vmatpush1.bf16.msra.mxu0 0
  %629 = vmatprep.mubr.bf16.mxu0 0
  %630 = vmatmul.mubr.bf16.gmra.mrb[0].mxu0 %v510
  %v631 = vpop.f32.mrb[0].mxu0
  %v632 = vadd.f32 %v547, %v631
  %v633 = vpop.f32.mrb[0].mxu0
  %v634 = vpop.f32.mrb[0].mxu0
  %v635 = vadd.f32 %v547, %v634
  %v636 = vpop.f32.mrb[0].mxu0
  %637 = vmatprep.mubr.bf16.mxu0 0
  %638 = vmatmul.mubr.bf16.gmra.mrb[0].mxu0 %v511
  %v639 = vpop.f32.mrb[0].mxu0
  %v640 = vadd.f32 %v547, %v639
  %v641 = vpop.f32.mrb[0].mxu0
  %v642 = vpop.f32.mrb[0].mxu0
  %v643 = vadd.f32 %v547, %v642
  %v644 = vpop.f32.mrb[0].mxu0
  %645 = vmatprep.mubr.bf16.mxu0 0
  %646 = vmatmul.mubr.bf16.gmra.mrb[0].mxu0 %v512
  %v647 = vpop.f32.mrb[0].mxu0
  %v648 = vadd.f32 %v547, %v647
  %v649 = vpop.f32.mrb[0].mxu0
  %v650 = vpop.f32.mrb[0].mxu0
  %v651 = vadd.f32 %v547, %v650
  %v652 = vpop.f32.mrb[0].mxu0
  %653 = vmatprep.mubr.bf16.mxu0 0
  %654 = vmatmul.mubr.bf16.gmra.mrb[0].mxu0 %v513
  %v655 = vpop.f32.mrb[0].mxu0
  %v656 = vadd.f32 %v547, %v655
  %v657 = vpop.f32.mrb[0].mxu0
  %v658 = vpop.f32.mrb[0].mxu0
  %v659 = vadd.f32 %v547, %v658
  %v660 = vpop.f32.mrb[0].mxu0
  %661 = vmatprep.mubr.bf16.mxu0 0
  %662 = vmatmul.mubr.bf16.gmra.mrb[0].mxu0 %v514
  %v663 = vpop.f32.mrb[0].mxu0
  %v664 = vadd.f32 %v547, %v663
  %v665 = vpop.f32.mrb[0].mxu0
  %v666 = vpop.f32.mrb[0].mxu0
  %v667 = vadd.f32 %v547, %v666
  %v668 = vpop.f32.mrb[0].mxu0
  %669 = vmatprep.mubr.bf16.mxu0 0
  %670 = vmatmul.mubr.bf16.gmra.mrb[0].mxu0 %v515
  %v671 = vpop.f32.mrb[0].mxu0
  %v672 = vadd.f32 %v547, %v671
  %v673 = vpop.f32.mrb[0].mxu0
  %v674 = vpop.f32.mrb[0].mxu0
  %v675 = vadd.f32 %v547, %v674
  %v676 = vpop.f32.mrb[0].mxu0
  %677 = vmatprep.mubr.bf16.mxu0 0
  %678 = vmatmul.mubr.bf16.gmra.mrb[0].mxu0 %v516
  %v679 = vpop.f32.mrb[0].mxu0
  %v680 = vadd.f32 %v547, %v679
  %v681 = vpop.f32.mrb[0].mxu0
  %v682 = vpop.f32.mrb[0].mxu0
  %v683 = vadd.f32 %v547, %v682
  %v684 = vpop.f32.mrb[0].mxu0
  %685 = vmatprep.mubr.bf16.mxu0 0
  %686 = vmatmul.mubr.bf16.gmra.mrb[0].mxu0 %v517
  %v687 = vpop.f32.mrb[0].mxu0
  %v688 = vadd.f32 %v547, %v687
  %v689 = vpop.f32.mrb[0].mxu0
  %v690 = vpop.f32.mrb[0].mxu0
  %v691 = vadd.f32 %v547, %v690
  %v692 = vpop.f32.mrb[0].mxu0
  %693 = vmatprep.mubr.bf16.mxu0 0
  %694 = vmatmul.mubr.bf16.gmra.mrb[0].mxu0 %v518
  %v695 = vpop.f32.mrb[0].mxu0
  %v696 = vadd.f32 %v547, %v695
  %v697 = vpop.f32.mrb[0].mxu0
  %v698 = vpop.f32.mrb[0].mxu0
  %v699 = vadd.f32 %v547, %v698
  %v700 = vpop.f32.mrb[0].mxu0
  %701 = vmatprep.mubr.bf16.mxu0 0
  %702 = vmatmul.mubr.bf16.gmra.mrb[0].mxu0 %v519
  %v703 = vpop.f32.mrb[0].mxu0
  %v704 = vadd.f32 %v547, %v703
  %v705 = vpop.f32.mrb[0].mxu0
  %v706 = vpop.f32.mrb[0].mxu0
  %v707 = vadd.f32 %v547, %v706
  %v708 = vpop.f32.mrb[0].mxu0
  %709 = vmatprep.mubr.bf16.mxu0 0
  %710 = vmatmul.mubr.bf16.gmra.mrb[0].mxu0 %v520
  %v711 = vpop.f32.mrb[0].mxu0
  %v712 = vadd.f32 %v547, %v711
  %v713 = vpop.f32.mrb[0].mxu0
  %v714 = vpop.f32.mrb[0].mxu0
  %v715 = vadd.f32 %v547, %v714
  %v716 = vpop.f32.mrb[0].mxu0
  %717 = vmatprep.mubr.bf16.mxu0 0
  %718 = vmatmul.mubr.bf16.gmra.mrb[0].mxu0 %v521
  %v719 = vpop.f32.mrb[0].mxu0
  %v720 = vadd.f32 %v547, %v719
  %v721 = vpop.f32.mrb[0].mxu0
  %v722 = vpop.f32.mrb[0].mxu0
  %v723 = vadd.f32 %v547, %v722
  %v724 = vpop.f32.mrb[0].mxu0
  %725 = vmatprep.mubr.bf16.mxu0 0
  %726 = vmatmul.mubr.bf16.gmra.mrb[0].mxu0 %v522
  %v727 = vpop.f32.mrb[0].mxu0
  %v728 = vadd.f32 %v547, %v727
  %v729 = vpop.f32.mrb[0].mxu0
  %v730 = vpop.f32.mrb[0].mxu0
  %v731 = vadd.f32 %v547, %v730
  %v732 = vpop.f32.mrb[0].mxu0
  %733 = vmatprep.mubr.bf16.mxu0 0
  %734 = vmatmul.mubr.bf16.gmra.mrb[0].mxu0 %v523
  %v735 = vpop.f32.mrb[0].mxu0
  %v736 = vadd.f32 %v547, %v735
  %v737 = vpop.f32.mrb[0].mxu0
  %v738 = vpop.f32.mrb[0].mxu0
  %v739 = vadd.f32 %v547, %v738
  %v740 = vpop.f32.mrb[0].mxu0
  %741 = vmatprep.mubr.bf16.mxu0 0
  %742 = vmatmul.mubr.bf16.gmra.mrb[0].mxu0 %v524
  %v743 = vpop.f32.mrb[0].mxu0
  %v744 = vadd.f32 %v547, %v743
  %v745 = vpop.f32.mrb[0].mxu0
  %v746 = vpop.f32.mrb[0].mxu0
  %v747 = vadd.f32 %v547, %v746
  %v748 = vpop.f32.mrb[0].mxu0
  %749 = vmatprep.mubr.bf16.mxu0 0
  %750 = vmatmul.mubr.bf16.gmra.mrb[0].mxu0 %v525
  %v751 = vpop.f32.mrb[0].mxu0
  %v752 = vadd.f32 %v547, %v751
  %v753 = vpop.f32.mrb[0].mxu0
  %v754 = vpop.f32.mrb[0].mxu0
  %v755 = vadd.f32 %v547, %v754
  %v756 = vpop.f32.mrb[0].mxu0
  %757 = vdwg.mxu0
  %v758 = vxor.u32 %v632, 2147483648
  %v759 = vxor.u32 %v635, 2147483648
  %v760 = vxor.u32 %v640, 2147483648
  %v761 = vxor.u32 %v643, 2147483648
  %v762 = vxor.u32 %v648, 2147483648
  %v763 = vxor.u32 %v651, 2147483648
  %v764 = vxor.u32 %v656, 2147483648
  %v765 = vxor.u32 %v659, 2147483648
  %v766 = vxor.u32 %v664, 2147483648
  %v767 = vxor.u32 %v667, 2147483648
  %v768 = vxor.u32 %v672, 2147483648
  %v769 = vxor.u32 %v675, 2147483648
  %v770 = vxor.u32 %v680, 2147483648
  %v771 = vxor.u32 %v683, 2147483648
  %v772 = vxor.u32 %v688, 2147483648
  %v773 = vxor.u32 %v691, 2147483648
  %v774 = vxor.u32 %v696, 2147483648
  %v775 = vxor.u32 %v699, 2147483648
  %v776 = vxor.u32 %v704, 2147483648
  %v777 = vxor.u32 %v707, 2147483648
  %v778 = vxor.u32 %v712, 2147483648
  %v779 = vxor.u32 %v715, 2147483648
  %v780 = vxor.u32 %v720, 2147483648
  %v781 = vxor.u32 %v723, 2147483648
  %v782 = vxor.u32 %v728, 2147483648
  %v783 = vxor.u32 %v731, 2147483648
  %v784 = vxor.u32 %v736, 2147483648
  %v785 = vxor.u32 %v739, 2147483648
  %v786 = vxor.u32 %v744, 2147483648
  %v787 = vxor.u32 %v747, 2147483648
  %v788 = vxor.u32 %v752, 2147483648
  %v789 = vxor.u32 %v755, 2147483648
  %v790 = vmul.f32 %v758, 1.442695
  %v791 = vpow.pop %v790
  %v792 = vmul.f32 %v759, 1.442695
  %v793 = vpow.pop %v792
  %v794 = vmul.f32 %v760, 1.442695
  %v795 = vpow.pop %v794
  %v796 = vmul.f32 %v761, 1.442695
  %v797 = vpow.pop %v796
  %v798 = vmul.f32 %v762, 1.442695
  %v799 = vpow.pop %v798
  %v800 = vmul.f32 %v763, 1.442695
  %v801 = vpow.pop %v800
  %v802 = vmul.f32 %v764, 1.442695
  %v803 = vpow.pop %v802
  %v804 = vmul.f32 %v765, 1.442695
  %v805 = vpow.pop %v804
  %v806 = vmul.f32 %v766, 1.442695
  %v807 = vpow.pop %v806
  %v808 = vmul.f32 %v767, 1.442695
  %v809 = vpow.pop %v808
  %v810 = vmul.f32 %v768, 1.442695
  %v811 = vpow.pop %v810
  %v812 = vmul.f32 %v769, 1.442695
  %v813 = vpow.pop %v812
  %v814 = vmul.f32 %v770, 1.442695
  %v815 = vpow.pop %v814
  %v816 = vmul.f32 %v771, 1.442695
  %v817 = vpow.pop %v816
  %v818 = vmul.f32 %v772, 1.442695
  %v819 = vpow.pop %v818
  %v820 = vmul.f32 %v773, 1.442695
  %v821 = vpow.pop %v820
  %v822 = vmul.f32 %v774, 1.442695
  %v823 = vpow.pop %v822
  %v824 = vmul.f32 %v775, 1.442695
  %v825 = vpow.pop %v824
  %v826 = vmul.f32 %v776, 1.442695
  %v827 = vpow.pop %v826
  %v828 = vmul.f32 %v777, 1.442695
  %v829 = vpow.pop %v828
  %v830 = vmul.f32 %v778, 1.442695
  %v831 = vpow.pop %v830
  %v832 = vmul.f32 %v779, 1.442695
  %v833 = vpow.pop %v832
  %v834 = vmul.f32 %v780, 1.442695
  %v835 = vpow.pop %v834
  %v836 = vmul.f32 %v781, 1.442695
  %v837 = vpow.pop %v836
  %v838 = vmul.f32 %v782, 1.442695
  %v839 = vpow.pop %v838
  %v840 = vmul.f32 %v783, 1.442695
  %v841 = vpow.pop %v840
  %v842 = vmul.f32 %v784, 1.442695
  %v843 = vpow.pop %v842
  %v844 = vmul.f32 %v785, 1.442695
  %v845 = vpow.pop %v844
  %v846 = vmul.f32 %v786, 1.442695
  %v847 = vpow.pop %v846
  %v848 = vmul.f32 %v787, 1.442695
  %v849 = vpow.pop %v848
  %v850 = vmul.f32 %v788, 1.442695
  %v851 = vpow.pop %v850
  %v852 = vmul.f32 %v789, 1.442695
  %v853 = vpow.pop %v852
  %v854 = vadd.f32 %v791, 1.0
  %v855 = vadd.f32 %v793, 1.0
  %v856 = vadd.f32 %v795, 1.0
  %v857 = vadd.f32 %v797, 1.0
  %v858 = vadd.f32 %v799, 1.0
  %v859 = vadd.f32 %v801, 1.0
  %v860 = vadd.f32 %v803, 1.0
  %v861 = vadd.f32 %v805, 1.0
  %v862 = vadd.f32 %v807, 1.0
  %v863 = vadd.f32 %v809, 1.0
  %v864 = vadd.f32 %v811, 1.0
  %v865 = vadd.f32 %v813, 1.0
  %v866 = vadd.f32 %v815, 1.0
  %v867 = vadd.f32 %v817, 1.0
  %v868 = vadd.f32 %v819, 1.0
  %v869 = vadd.f32 %v821, 1.0
  %v870 = vadd.f32 %v823, 1.0
  %v871 = vadd.f32 %v825, 1.0
  %v872 = vadd.f32 %v827, 1.0
  %v873 = vadd.f32 %v829, 1.0
  %v874 = vadd.f32 %v831, 1.0
  %v875 = vadd.f32 %v833, 1.0
  %v876 = vadd.f32 %v835, 1.0
  %v877 = vadd.f32 %v837, 1.0
  %v878 = vadd.f32 %v839, 1.0
  %v879 = vadd.f32 %v841, 1.0
  %v880 = vadd.f32 %v843, 1.0
  %v881 = vadd.f32 %v845, 1.0
  %v882 = vadd.f32 %v847, 1.0
  %v883 = vadd.f32 %v849, 1.0
  %v884 = vadd.f32 %v851, 1.0
  %v885 = vadd.f32 %v853, 1.0
  %v886 = vrcp.pop %v854
  %v887 = vmul.f32 1.0, %v886
  %v888 = vrcp.pop %v855
  %v889 = vmul.f32 1.0, %v888
  %v890 = vrcp.pop %v856
  %v891 = vmul.f32 1.0, %v890
  %v892 = vrcp.pop %v857
  %v893 = vmul.f32 1.0, %v892
  %v894 = vrcp.pop %v858
  %v895 = vmul.f32 1.0, %v894
  %v896 = vrcp.pop %v859
  %v897 = vmul.f32 1.0, %v896
  %v898 = vrcp.pop %v860
  %v899 = vmul.f32 1.0, %v898
  %v900 = vrcp.pop %v861
  %v901 = vmul.f32 1.0, %v900
  %v902 = vrcp.pop %v862
  %v903 = vmul.f32 1.0, %v902
  %v904 = vrcp.pop %v863
  %v905 = vmul.f32 1.0, %v904
  %v906 = vrcp.pop %v864
  %v907 = vmul.f32 1.0, %v906
  %v908 = vrcp.pop %v865
  %v909 = vmul.f32 1.0, %v908
  %v910 = vrcp.pop %v866
  %v911 = vmul.f32 1.0, %v910
  %v912 = vrcp.pop %v867
  %v913 = vmul.f32 1.0, %v912
  %v914 = vrcp.pop %v868
  %v915 = vmul.f32 1.0, %v914
  %v916 = vrcp.pop %v869
  %v917 = vmul.f32 1.0, %v916
  %v918 = vrcp.pop %v870
  %v919 = vmul.f32 1.0, %v918
  %v920 = vrcp.pop %v871
  %v921 = vmul.f32 1.0, %v920
  %v922 = vrcp.pop %v872
  %v923 = vmul.f32 1.0, %v922
  %v924 = vrcp.pop %v873
  %v925 = vmul.f32 1.0, %v924
  %v926 = vrcp.pop %v874
  %v927 = vmul.f32 1.0, %v926
  %v928 = vrcp.pop %v875
  %v929 = vmul.f32 1.0, %v928
  %v930 = vrcp.pop %v876
  %v931 = vmul.f32 1.0, %v930
  %v932 = vrcp.pop %v877
  %v933 = vmul.f32 1.0, %v932
  %v934 = vrcp.pop %v878
  %v935 = vmul.f32 1.0, %v934
  %v936 = vrcp.pop %v879
  %v937 = vmul.f32 1.0, %v936
  %v938 = vrcp.pop %v880
  %v939 = vmul.f32 1.0, %v938
  %v940 = vrcp.pop %v881
  %v941 = vmul.f32 1.0, %v940
  %v942 = vrcp.pop %v882
  %v943 = vmul.f32 1.0, %v942
  %v944 = vrcp.pop %v883
  %v945 = vmul.f32 1.0, %v944
  %v946 = vrcp.pop %v884
  %v947 = vmul.f32 1.0, %v946
  %v948 = vrcp.pop %v885
  %v949 = vmul.f32 1.0, %v948
  %v950 = vpack.c.bf16 %v889, %v887
  %v951 = vpack.c.bf16 %v893, %v891
  %v952 = vpack.c.bf16 %v897, %v895
  %v953 = vpack.c.bf16 %v901, %v899
  %v954 = vpack.c.bf16 %v905, %v903
  %v955 = vpack.c.bf16 %v909, %v907
  %v956 = vpack.c.bf16 %v913, %v911
  %v957 = vpack.c.bf16 %v917, %v915
  %v958 = vpack.c.bf16 %v921, %v919
  %v959 = vpack.c.bf16 %v925, %v923
  %v960 = vpack.c.bf16 %v929, %v927
  %v961 = vpack.c.bf16 %v933, %v931
  %v962 = vpack.c.bf16 %v937, %v935
  %v963 = vpack.c.bf16 %v941, %v939
  %v964 = vpack.c.bf16 %v945, %v943
  %v965 = vpack.c.bf16 %v949, %v947
  %v966 = vld [vmem:[%s5] sm:$0xf]
  %v967 = vld [vmem:[%s5 + $0x4] sm:$0xf]
  %v968 = vld [vmem:[%s5 + $0x8] sm:$0xf]
  %v969 = vld [vmem:[%s5 + $0xc] sm:$0xf]
  %v970 = vld [vmem:[%s5 + $0x10] sm:$0xf]
  %v971 = vld [vmem:[%s5 + $0x14] sm:$0xf]
  %v972 = vld [vmem:[%s5 + $0x18] sm:$0xf]
  %v973 = vld [vmem:[%s5 + $0x1c] sm:$0xf]
  %v974 = vld [vmem:[%s5 + $0x20] sm:$0xf]
  %v975 = vld [vmem:[%s5 + $0x24] sm:$0xf]
  %v976 = vld [vmem:[%s5 + $0x28] sm:$0xf]
  %v977 = vld [vmem:[%s5 + $0x2c] sm:$0xf]
  %v978 = vld [vmem:[%s5 + $0x30] sm:$0xf]
  %v979 = vld [vmem:[%s5 + $0x34] sm:$0xf]
  %v980 = vld [vmem:[%s5 + $0x38] sm:$0xf]
  %v981 = vld [vmem:[%s5 + $0x3c] sm:$0xf]
  %v982 = vld [vmem:[%s6] sm:$0x1]
  %v984 = vlaneseq
  %v985 = vshrl.u32 %v984, 7
  %v986 = vsub.s32 0, %v985
  %v987 = vrot.slane %v982, %v986
  %v1005 = vunpack.c.l.b16 %v966
  %v1006 = vunpack.c.l.b16 %v967
  %v1007 = vunpack.c.l.b16 %v968
  %v1008 = vunpack.c.l.b16 %v969
  %v1009 = vunpack.c.l.b16 %v970
  %v1010 = vunpack.c.l.b16 %v971
  %v1011 = vunpack.c.l.b16 %v972
  %v1012 = vunpack.c.l.b16 %v973
  %v1013 = vunpack.c.l.b16 %v974
  %v1014 = vunpack.c.l.b16 %v975
  %v1015 = vunpack.c.l.b16 %v976
  %v1016 = vunpack.c.l.b16 %v977
  %v1017 = vunpack.c.l.b16 %v978
  %v1018 = vunpack.c.l.b16 %v979
  %v1019 = vunpack.c.l.b16 %v980
  %v1020 = vunpack.c.l.b16 %v981
  %v1021 = vpack.c.b16 %v1006, %v1005
  %v1022 = vpack.c.b16 %v1008, %v1007
  %v1023 = vpack.c.b16 %v1010, %v1009
  %v1024 = vpack.c.b16 %v1012, %v1011
  %v1025 = vpack.c.b16 %v1014, %v1013
  %v1026 = vpack.c.b16 %v1016, %v1015
  %v1027 = vpack.c.b16 %v1018, %v1017
  %v1028 = vpack.c.b16 %v1020, %v1019
  %1037 = vmatprep.subr.bf16.mxu0 0
  %1038 = vmatpush1.bf16.msra.mxu0 %v1021
  %1039 = vmatprep.subr.bf16.mxu0 0
  %1040 = vmatpush1.bf16.msra.mxu0 %v1022
  %1041 = vmatprep.subr.bf16.mxu0 0
  %1042 = vmatpush1.bf16.msra.mxu0 %v1023
  %1043 = vmatprep.subr.bf16.mxu0 0
  %1044 = vmatpush1.bf16.msra.mxu0 %v1024
  %1045 = vmatprep.subr.bf16.mxu0 0
  %1046 = vmatpush1.bf16.msra.mxu0 %v1025
  %1047 = vmatprep.subr.bf16.mxu0 0
  %1048 = vmatpush1.bf16.msra.mxu0 %v1026
  %1049 = vmatprep.subr.bf16.mxu0 0
  %1050 = vmatpush1.bf16.msra.mxu0 %v1027
  %1051 = vmatprep.subr.bf16.mxu0 0
  %1052 = vmatpush1.bf16.msra.mxu0 %v1028
  %1053 = vmatprep.subr.bf16.mxu0 0
  %1054 = vmatpush1.bf16.msra.mxu0 0
  %1055 = vmatprep.subr.bf16.mxu0 0
  %1056 = vmatpush1.bf16.msra.mxu0 0
  %1057 = vmatprep.subr.bf16.mxu0 0
  %1058 = vmatpush1.bf16.msra.mxu0 0
  %1059 = vmatprep.subr.bf16.mxu0 0
  %1060 = vmatpush1.bf16.msra.mxu0 0
  %1061 = vmatprep.subr.bf16.mxu0 0
  %1062 = vmatpush1.bf16.msra.mxu0 0
  %1063 = vmatprep.subr.bf16.mxu0 0
  %1064 = vmatpush1.bf16.msra.mxu0 0
  %1065 = vmatprep.subr.bf16.mxu0 0
  %1066 = vmatpush1.bf16.msra.mxu0 0
  %1067 = vmatprep.subr.bf16.mxu0 0
  %1068 = vmatpush1.bf16.msra.mxu0 0
  %1069 = vmatprep.mubr.bf16.mxu0 0
  %1070 = vmatmul.mubr.bf16.gmra.mrb[0].mxu0 %v950
  %v1071 = vpop.f32.mrb[0].mxu0
  %v1072 = vadd.f32 %v987, %v1071
  %v1073 = vpop.f32.mrb[0].mxu0
  %v1074 = vpop.f32.mrb[0].mxu0
  %v1075 = vadd.f32 %v987, %v1074
  %v1076 = vpop.f32.mrb[0].mxu0
  %1077 = vmatprep.mubr.bf16.mxu0 0
  %1078 = vmatmul.mubr.bf16.gmra.mrb[0].mxu0 %v951
  %v1079 = vpop.f32.mrb[0].mxu0
  %v1080 = vadd.f32 %v987, %v1079
  %v1081 = vpop.f32.mrb[0].mxu0
  %v1082 = vpop.f32.mrb[0].mxu0
  %v1083 = vadd.f32 %v987, %v1082
  %v1084 = vpop.f32.mrb[0].mxu0
  %1085 = vmatprep.mubr.bf16.mxu0 0
  %1086 = vmatmul.mubr.bf16.gmra.mrb[0].mxu0 %v952
  %v1087 = vpop.f32.mrb[0].mxu0
  %v1088 = vadd.f32 %v987, %v1087
  %v1089 = vpop.f32.mrb[0].mxu0
  %v1090 = vpop.f32.mrb[0].mxu0
  %v1091 = vadd.f32 %v987, %v1090
  %v1092 = vpop.f32.mrb[0].mxu0
  %1093 = vmatprep.mubr.bf16.mxu0 0
  %1094 = vmatmul.mubr.bf16.gmra.mrb[0].mxu0 %v953
  %v1095 = vpop.f32.mrb[0].mxu0
  %v1096 = vadd.f32 %v987, %v1095
  %v1097 = vpop.f32.mrb[0].mxu0
  %v1098 = vpop.f32.mrb[0].mxu0
  %v1099 = vadd.f32 %v987, %v1098
  %v1100 = vpop.f32.mrb[0].mxu0
  %1101 = vmatprep.mubr.bf16.mxu0 0
  %1102 = vmatmul.mubr.bf16.gmra.mrb[0].mxu0 %v954
  %v1103 = vpop.f32.mrb[0].mxu0
  %v1104 = vadd.f32 %v987, %v1103
  %v1105 = vpop.f32.mrb[0].mxu0
  %v1106 = vpop.f32.mrb[0].mxu0
  %v1107 = vadd.f32 %v987, %v1106
  %v1108 = vpop.f32.mrb[0].mxu0
  %1109 = vmatprep.mubr.bf16.mxu0 0
  %1110 = vmatmul.mubr.bf16.gmra.mrb[0].mxu0 %v955
  %v1111 = vpop.f32.mrb[0].mxu0
  %v1112 = vadd.f32 %v987, %v1111
  %v1113 = vpop.f32.mrb[0].mxu0
  %v1114 = vpop.f32.mrb[0].mxu0
  %v1115 = vadd.f32 %v987, %v1114
  %v1116 = vpop.f32.mrb[0].mxu0
  %1117 = vmatprep.mubr.bf16.mxu0 0
  %1118 = vmatmul.mubr.bf16.gmra.mrb[0].mxu0 %v956
  %v1119 = vpop.f32.mrb[0].mxu0
  %v1120 = vadd.f32 %v987, %v1119
  %v1121 = vpop.f32.mrb[0].mxu0
  %v1122 = vpop.f32.mrb[0].mxu0
  %v1123 = vadd.f32 %v987, %v1122
  %v1124 = vpop.f32.mrb[0].mxu0
  %1125 = vmatprep.mubr.bf16.mxu0 0
  %1126 = vmatmul.mubr.bf16.gmra.mrb[0].mxu0 %v957
  %v1127 = vpop.f32.mrb[0].mxu0
  %v1128 = vadd.f32 %v987, %v1127
  %v1129 = vpop.f32.mrb[0].mxu0
  %v1130 = vpop.f32.mrb[0].mxu0
  %v1131 = vadd.f32 %v987, %v1130
  %v1132 = vpop.f32.mrb[0].mxu0
  %1133 = vmatprep.mubr.bf16.mxu0 0
  %1134 = vmatmul.mubr.bf16.gmra.mrb[0].mxu0 %v958
  %v1135 = vpop.f32.mrb[0].mxu0
  %v1136 = vadd.f32 %v987, %v1135
  %v1137 = vpop.f32.mrb[0].mxu0
  %v1138 = vpop.f32.mrb[0].mxu0
  %v1139 = vadd.f32 %v987, %v1138
  %v1140 = vpop.f32.mrb[0].mxu0
  %1141 = vmatprep.mubr.bf16.mxu0 0
  %1142 = vmatmul.mubr.bf16.gmra.mrb[0].mxu0 %v959
  %v1143 = vpop.f32.mrb[0].mxu0
  %v1144 = vadd.f32 %v987, %v1143
  %v1145 = vpop.f32.mrb[0].mxu0
  %v1146 = vpop.f32.mrb[0].mxu0
  %v1147 = vadd.f32 %v987, %v1146
  %v1148 = vpop.f32.mrb[0].mxu0
  %1149 = vmatprep.mubr.bf16.mxu0 0
  %1150 = vmatmul.mubr.bf16.gmra.mrb[0].mxu0 %v960
  %v1151 = vpop.f32.mrb[0].mxu0
  %v1152 = vadd.f32 %v987, %v1151
  %v1153 = vpop.f32.mrb[0].mxu0
  %v1154 = vpop.f32.mrb[0].mxu0
  %v1155 = vadd.f32 %v987, %v1154
  %v1156 = vpop.f32.mrb[0].mxu0
  %1157 = vmatprep.mubr.bf16.mxu0 0
  %1158 = vmatmul.mubr.bf16.gmra.mrb[0].mxu0 %v961
  %v1159 = vpop.f32.mrb[0].mxu0
  %v1160 = vadd.f32 %v987, %v1159
  %v1161 = vpop.f32.mrb[0].mxu0
  %v1162 = vpop.f32.mrb[0].mxu0
  %v1163 = vadd.f32 %v987, %v1162
  %v1164 = vpop.f32.mrb[0].mxu0
  %1165 = vmatprep.mubr.bf16.mxu0 0
  %1166 = vmatmul.mubr.bf16.gmra.mrb[0].mxu0 %v962
  %v1167 = vpop.f32.mrb[0].mxu0
  %v1168 = vadd.f32 %v987, %v1167
  %v1169 = vpop.f32.mrb[0].mxu0
  %v1170 = vpop.f32.mrb[0].mxu0
  %v1171 = vadd.f32 %v987, %v1170
  %v1172 = vpop.f32.mrb[0].mxu0
  %1173 = vmatprep.mubr.bf16.mxu0 0
  %1174 = vmatmul.mubr.bf16.gmra.mrb[0].mxu0 %v963
  %v1175 = vpop.f32.mrb[0].mxu0
  %v1176 = vadd.f32 %v987, %v1175
  %v1177 = vpop.f32.mrb[0].mxu0
  %v1178 = vpop.f32.mrb[0].mxu0
  %v1179 = vadd.f32 %v987, %v1178
  %v1180 = vpop.f32.mrb[0].mxu0
  %1181 = vmatprep.mubr.bf16.mxu0 0
  %1182 = vmatmul.mubr.bf16.gmra.mrb[0].mxu0 %v964
  %v1183 = vpop.f32.mrb[0].mxu0
  %v1184 = vadd.f32 %v987, %v1183
  %v1185 = vpop.f32.mrb[0].mxu0
  %v1186 = vpop.f32.mrb[0].mxu0
  %v1187 = vadd.f32 %v987, %v1186
  %v1188 = vpop.f32.mrb[0].mxu0
  %1189 = vmatprep.mubr.bf16.mxu0 0
  %1190 = vmatmul.mubr.bf16.gmra.mrb[0].mxu0 %v965
  %v1191 = vpop.f32.mrb[0].mxu0
  %v1192 = vadd.f32 %v987, %v1191
  %v1193 = vpop.f32.mrb[0].mxu0
  %v1194 = vpop.f32.mrb[0].mxu0
  %v1195 = vadd.f32 %v987, %v1194
  %v1196 = vpop.f32.mrb[0].mxu0
  %1197 = vdwg.mxu0
  %v1198 = vxor.u32 %v1072, 2147483648
  %v1199 = vxor.u32 %v1075, 2147483648
  %v1200 = vxor.u32 %v1080, 2147483648
  %v1201 = vxor.u32 %v1083, 2147483648
  %v1202 = vxor.u32 %v1088, 2147483648
  %v1203 = vxor.u32 %v1091, 2147483648
  %v1204 = vxor.u32 %v1096, 2147483648
  %v1205 = vxor.u32 %v1099, 2147483648
  %v1206 = vxor.u32 %v1104, 2147483648
  %v1207 = vxor.u32 %v1107, 2147483648
  %v1208 = vxor.u32 %v1112, 2147483648
  %v1209 = vxor.u32 %v1115, 2147483648
  %v1210 = vxor.u32 %v1120, 2147483648
  %v1211 = vxor.u32 %v1123, 2147483648
  %v1212 = vxor.u32 %v1128, 2147483648
  %v1213 = vxor.u32 %v1131, 2147483648
  %v1214 = vxor.u32 %v1136, 2147483648
  %v1215 = vxor.u32 %v1139, 2147483648
  %v1216 = vxor.u32 %v1144, 2147483648
  %v1217 = vxor.u32 %v1147, 2147483648
  %v1218 = vxor.u32 %v1152, 2147483648
  %v1219 = vxor.u32 %v1155, 2147483648
  %v1220 = vxor.u32 %v1160, 2147483648
  %v1221 = vxor.u32 %v1163, 2147483648
  %v1222 = vxor.u32 %v1168, 2147483648
  %v1223 = vxor.u32 %v1171, 2147483648
  %v1224 = vxor.u32 %v1176, 2147483648
  %v1225 = vxor.u32 %v1179, 2147483648
  %v1226 = vxor.u32 %v1184, 2147483648
  %v1227 = vxor.u32 %v1187, 2147483648
  %v1228 = vxor.u32 %v1192, 2147483648
  %v1229 = vxor.u32 %v1195, 2147483648
  %v1230 = vmul.f32 %v1198, 1.442695
  %v1231 = vpow.pop %v1230
  %v1232 = vmul.f32 %v1199, 1.442695
  %v1233 = vpow.pop %v1232
  %v1234 = vmul.f32 %v1200, 1.442695
  %v1235 = vpow.pop %v1234
  %v1236 = vmul.f32 %v1201, 1.442695
  %v1237 = vpow.pop %v1236
  %v1238 = vmul.f32 %v1202, 1.442695
  %v1239 = vpow.pop %v1238
  %v1240 = vmul.f32 %v1203, 1.442695
  %v1241 = vpow.pop %v1240
  %v1242 = vmul.f32 %v1204, 1.442695
  %v1243 = vpow.pop %v1242
  %v1244 = vmul.f32 %v1205, 1.442695
  %v1245 = vpow.pop %v1244
  %v1246 = vmul.f32 %v1206, 1.442695
  %v1247 = vpow.pop %v1246
  %v1248 = vmul.f32 %v1207, 1.442695
  %v1249 = vpow.pop %v1248
  %v1250 = vmul.f32 %v1208, 1.442695
  %v1251 = vpow.pop %v1250
  %v1252 = vmul.f32 %v1209, 1.442695
  %v1253 = vpow.pop %v1252
  %v1254 = vmul.f32 %v1210, 1.442695
  %v1255 = vpow.pop %v1254
  %v1256 = vmul.f32 %v1211, 1.442695
  %v1257 = vpow.pop %v1256
  %v1258 = vmul.f32 %v1212, 1.442695
  %v1259 = vpow.pop %v1258
  %v1260 = vmul.f32 %v1213, 1.442695
  %v1261 = vpow.pop %v1260
  %v1262 = vmul.f32 %v1214, 1.442695
  %v1263 = vpow.pop %v1262
  %v1264 = vmul.f32 %v1215, 1.442695
  %v1265 = vpow.pop %v1264
  %v1266 = vmul.f32 %v1216, 1.442695
  %v1267 = vpow.pop %v1266
  %v1268 = vmul.f32 %v1217, 1.442695
  %v1269 = vpow.pop %v1268
  %v1270 = vmul.f32 %v1218, 1.442695
  %v1271 = vpow.pop %v1270
  %v1272 = vmul.f32 %v1219, 1.442695
  %v1273 = vpow.pop %v1272
  %v1274 = vmul.f32 %v1220, 1.442695
  %v1275 = vpow.pop %v1274
  %v1276 = vmul.f32 %v1221, 1.442695
  %v1277 = vpow.pop %v1276
  %v1278 = vmul.f32 %v1222, 1.442695
  %v1279 = vpow.pop %v1278
  %v1280 = vmul.f32 %v1223, 1.442695
  %v1281 = vpow.pop %v1280
  %v1282 = vmul.f32 %v1224, 1.442695
  %v1283 = vpow.pop %v1282
  %v1284 = vmul.f32 %v1225, 1.442695
  %v1285 = vpow.pop %v1284
  %v1286 = vmul.f32 %v1226, 1.442695
  %v1287 = vpow.pop %v1286
  %v1288 = vmul.f32 %v1227, 1.442695
  %v1289 = vpow.pop %v1288
  %v1290 = vmul.f32 %v1228, 1.442695
  %v1291 = vpow.pop %v1290
  %v1292 = vmul.f32 %v1229, 1.442695
  %v1293 = vpow.pop %v1292
  %v1294 = vadd.f32 %v1231, 1.0
  %v1295 = vadd.f32 %v1233, 1.0
  %v1296 = vadd.f32 %v1235, 1.0
  %v1297 = vadd.f32 %v1237, 1.0
  %v1298 = vadd.f32 %v1239, 1.0
  %v1299 = vadd.f32 %v1241, 1.0
  %v1300 = vadd.f32 %v1243, 1.0
  %v1301 = vadd.f32 %v1245, 1.0
  %v1302 = vadd.f32 %v1247, 1.0
  %v1303 = vadd.f32 %v1249, 1.0
  %v1304 = vadd.f32 %v1251, 1.0
  %v1305 = vadd.f32 %v1253, 1.0
  %v1306 = vadd.f32 %v1255, 1.0
  %v1307 = vadd.f32 %v1257, 1.0
  %v1308 = vadd.f32 %v1259, 1.0
  %v1309 = vadd.f32 %v1261, 1.0
  %v1310 = vadd.f32 %v1263, 1.0
  %v1311 = vadd.f32 %v1265, 1.0
  %v1312 = vadd.f32 %v1267, 1.0
  %v1313 = vadd.f32 %v1269, 1.0
  %v1314 = vadd.f32 %v1271, 1.0
  %v1315 = vadd.f32 %v1273, 1.0
  %v1316 = vadd.f32 %v1275, 1.0
  %v1317 = vadd.f32 %v1277, 1.0
  %v1318 = vadd.f32 %v1279, 1.0
  %v1319 = vadd.f32 %v1281, 1.0
  %v1320 = vadd.f32 %v1283, 1.0
  %v1321 = vadd.f32 %v1285, 1.0
  %v1322 = vadd.f32 %v1287, 1.0
  %v1323 = vadd.f32 %v1289, 1.0
  %v1324 = vadd.f32 %v1291, 1.0
  %v1325 = vadd.f32 %v1293, 1.0
  %v1326 = vrcp.pop %v1294
  %v1327 = vmul.f32 1.0, %v1326
  %v1328 = vrcp.pop %v1295
  %v1329 = vmul.f32 1.0, %v1328
  %v1330 = vrcp.pop %v1296
  %v1331 = vmul.f32 1.0, %v1330
  %v1332 = vrcp.pop %v1297
  %v1333 = vmul.f32 1.0, %v1332
  %v1334 = vrcp.pop %v1298
  %v1335 = vmul.f32 1.0, %v1334
  %v1336 = vrcp.pop %v1299
  %v1337 = vmul.f32 1.0, %v1336
  %v1338 = vrcp.pop %v1300
  %v1339 = vmul.f32 1.0, %v1338
  %v1340 = vrcp.pop %v1301
  %v1341 = vmul.f32 1.0, %v1340
  %v1342 = vrcp.pop %v1302
  %v1343 = vmul.f32 1.0, %v1342
  %v1344 = vrcp.pop %v1303
  %v1345 = vmul.f32 1.0, %v1344
  %v1346 = vrcp.pop %v1304
  %v1347 = vmul.f32 1.0, %v1346
  %v1348 = vrcp.pop %v1305
  %v1349 = vmul.f32 1.0, %v1348
  %v1350 = vrcp.pop %v1306
  %v1351 = vmul.f32 1.0, %v1350
  %v1352 = vrcp.pop %v1307
  %v1353 = vmul.f32 1.0, %v1352
  %v1354 = vrcp.pop %v1308
  %v1355 = vmul.f32 1.0, %v1354
  %v1356 = vrcp.pop %v1309
  %v1357 = vmul.f32 1.0, %v1356
  %v1358 = vrcp.pop %v1310
  %v1359 = vmul.f32 1.0, %v1358
  %v1360 = vrcp.pop %v1311
  %v1361 = vmul.f32 1.0, %v1360
  %v1362 = vrcp.pop %v1312
  %v1363 = vmul.f32 1.0, %v1362
  %v1364 = vrcp.pop %v1313
  %v1365 = vmul.f32 1.0, %v1364
  %v1366 = vrcp.pop %v1314
  %v1367 = vmul.f32 1.0, %v1366
  %v1368 = vrcp.pop %v1315
  %v1369 = vmul.f32 1.0, %v1368
  %v1370 = vrcp.pop %v1316
  %v1371 = vmul.f32 1.0, %v1370
  %v1372 = vrcp.pop %v1317
  %v1373 = vmul.f32 1.0, %v1372
  %v1374 = vrcp.pop %v1318
  %v1375 = vmul.f32 1.0, %v1374
  %v1376 = vrcp.pop %v1319
  %v1377 = vmul.f32 1.0, %v1376
  %v1378 = vrcp.pop %v1320
  %v1379 = vmul.f32 1.0, %v1378
  %v1380 = vrcp.pop %v1321
  %v1381 = vmul.f32 1.0, %v1380
  %v1382 = vrcp.pop %v1322
  %v1383 = vmul.f32 1.0, %v1382
  %v1384 = vrcp.pop %v1323
  %v1385 = vmul.f32 1.0, %v1384
  %v1386 = vrcp.pop %v1324
  %v1387 = vmul.f32 1.0, %v1386
  %v1388 = vrcp.pop %v1325
  %v1389 = vmul.f32 1.0, %v1388
  %v1390 = vpack.c.bf16 %v1329, %v1327
  %v1391 = vpack.c.bf16 %v1333, %v1331
  %v1392 = vpack.c.bf16 %v1337, %v1335
  %v1393 = vpack.c.bf16 %v1341, %v1339
  %v1394 = vpack.c.bf16 %v1345, %v1343
  %v1395 = vpack.c.bf16 %v1349, %v1347
  %v1396 = vpack.c.bf16 %v1353, %v1351
  %v1397 = vpack.c.bf16 %v1357, %v1355
  %v1398 = vpack.c.bf16 %v1361, %v1359
  %v1399 = vpack.c.bf16 %v1365, %v1363
  %v1400 = vpack.c.bf16 %v1369, %v1367
  %v1401 = vpack.c.bf16 %v1373, %v1371
  %v1402 = vpack.c.bf16 %v1377, %v1375
  %v1403 = vpack.c.bf16 %v1381, %v1379
  %v1404 = vpack.c.bf16 %v1385, %v1383
  %v1405 = vpack.c.bf16 %v1389, %v1387
  %v1406 = vld [vmem:[%s7] sm:$0xf]
  %v1407 = vld [vmem:[%s7 + $0x4] sm:$0xf]
  %v1408 = vld [vmem:[%s7 + $0x8] sm:$0xf]
  %v1409 = vld [vmem:[%s7 + $0xc] sm:$0xf]
  %v1410 = vld [vmem:[%s7 + $0x10] sm:$0xf]
  %v1411 = vld [vmem:[%s7 + $0x14] sm:$0xf]
  %v1412 = vld [vmem:[%s7 + $0x18] sm:$0xf]
  %v1413 = vld [vmem:[%s7 + $0x1c] sm:$0xf]
  %v1414 = vld [vmem:[%s7 + $0x20] sm:$0xf]
  %v1415 = vld [vmem:[%s7 + $0x24] sm:$0xf]
  %v1416 = vld [vmem:[%s7 + $0x28] sm:$0xf]
  %v1417 = vld [vmem:[%s7 + $0x2c] sm:$0xf]
  %v1418 = vld [vmem:[%s7 + $0x30] sm:$0xf]
  %v1419 = vld [vmem:[%s7 + $0x34] sm:$0xf]
  %v1420 = vld [vmem:[%s7 + $0x38] sm:$0xf]
  %v1421 = vld [vmem:[%s7 + $0x3c] sm:$0xf]
  %v1422 = vld [vmem:[%s8] sm:$0x1]
  %v1424 = vlaneseq
  %v1425 = vshrl.u32 %v1424, 7
  %v1426 = vsub.s32 0, %v1425
  %v1427 = vrot.slane %v1422, %v1426
  %v1445 = vunpack.c.l.b16 %v1406
  %v1446 = vunpack.c.l.b16 %v1407
  %v1447 = vunpack.c.l.b16 %v1408
  %v1448 = vunpack.c.l.b16 %v1409
  %v1449 = vunpack.c.l.b16 %v1410
  %v1450 = vunpack.c.l.b16 %v1411
  %v1451 = vunpack.c.l.b16 %v1412
  %v1452 = vunpack.c.l.b16 %v1413
  %v1453 = vunpack.c.l.b16 %v1414
  %v1454 = vunpack.c.l.b16 %v1415
  %v1455 = vunpack.c.l.b16 %v1416
  %v1456 = vunpack.c.l.b16 %v1417
  %v1457 = vunpack.c.l.b16 %v1418
  %v1458 = vunpack.c.l.b16 %v1419
  %v1459 = vunpack.c.l.b16 %v1420
  %v1460 = vunpack.c.l.b16 %v1421
  %v1461 = vpack.c.b16 %v1446, %v1445
  %v1462 = vpack.c.b16 %v1448, %v1447
  %v1463 = vpack.c.b16 %v1450, %v1449
  %v1464 = vpack.c.b16 %v1452, %v1451
  %v1465 = vpack.c.b16 %v1454, %v1453
  %v1466 = vpack.c.b16 %v1456, %v1455
  %v1467 = vpack.c.b16 %v1458, %v1457
  %v1468 = vpack.c.b16 %v1460, %v1459
  %1477 = vmatprep.subr.bf16.mxu0 0
  %1478 = vmatpush1.bf16.msra.mxu0 %v1461
  %1479 = vmatprep.subr.bf16.mxu0 0
  %1480 = vmatpush1.bf16.msra.mxu0 %v1462
  %1481 = vmatprep.subr.bf16.mxu0 0
  %1482 = vmatpush1.bf16.msra.mxu0 %v1463
  %1483 = vmatprep.subr.bf16.mxu0 0
  %1484 = vmatpush1.bf16.msra.mxu0 %v1464
  %1485 = vmatprep.subr.bf16.mxu0 0
  %1486 = vmatpush1.bf16.msra.mxu0 %v1465
  %1487 = vmatprep.subr.bf16.mxu0 0
  %1488 = vmatpush1.bf16.msra.mxu0 %v1466
  %1489 = vmatprep.subr.bf16.mxu0 0
  %1490 = vmatpush1.bf16.msra.mxu0 %v1467
  %1491 = vmatprep.subr.bf16.mxu0 0
  %1492 = vmatpush1.bf16.msra.mxu0 %v1468
  %1493 = vmatprep.subr.bf16.mxu0 0
  %1494 = vmatpush1.bf16.msra.mxu0 0
  %1495 = vmatprep.subr.bf16.mxu0 0
  %1496 = vmatpush1.bf16.msra.mxu0 0
  %1497 = vmatprep.subr.bf16.mxu0 0
  %1498 = vmatpush1.bf16.msra.mxu0 0
  %1499 = vmatprep.subr.bf16.mxu0 0
  %1500 = vmatpush1.bf16.msra.mxu0 0
  %1501 = vmatprep.subr.bf16.mxu0 0
  %1502 = vmatpush1.bf16.msra.mxu0 0
  %1503 = vmatprep.subr.bf16.mxu0 0
  %1504 = vmatpush1.bf16.msra.mxu0 0
  %1505 = vmatprep.subr.bf16.mxu0 0
  %1506 = vmatpush1.bf16.msra.mxu0 0
  %1507 = vmatprep.subr.bf16.mxu0 0
  %1508 = vmatpush1.bf16.msra.mxu0 0
  %1509 = vmatprep.mubr.bf16.mxu0 0
  %1510 = vmatmul.mubr.bf16.gmra.mrb[0].mxu0 %v1390
  %v1511 = vpop.f32.mrb[0].mxu0
  %v1512 = vadd.f32 %v1427, %v1511
  %v1513 = vpop.f32.mrb[0].mxu0
  %v1514 = vpop.f32.mrb[0].mxu0
  %v1515 = vadd.f32 %v1427, %v1514
  %v1516 = vpop.f32.mrb[0].mxu0
  %1517 = vmatprep.mubr.bf16.mxu0 0
  %1518 = vmatmul.mubr.bf16.gmra.mrb[0].mxu0 %v1391
  %v1519 = vpop.f32.mrb[0].mxu0
  %v1520 = vadd.f32 %v1427, %v1519
  %v1521 = vpop.f32.mrb[0].mxu0
  %v1522 = vpop.f32.mrb[0].mxu0
  %v1523 = vadd.f32 %v1427, %v1522
  %v1524 = vpop.f32.mrb[0].mxu0
  %1525 = vmatprep.mubr.bf16.mxu0 0
  %1526 = vmatmul.mubr.bf16.gmra.mrb[0].mxu0 %v1392
  %v1527 = vpop.f32.mrb[0].mxu0
  %v1528 = vadd.f32 %v1427, %v1527
  %v1529 = vpop.f32.mrb[0].mxu0
  %v1530 = vpop.f32.mrb[0].mxu0
  %v1531 = vadd.f32 %v1427, %v1530
  %v1532 = vpop.f32.mrb[0].mxu0
  %1533 = vmatprep.mubr.bf16.mxu0 0
  %1534 = vmatmul.mubr.bf16.gmra.mrb[0].mxu0 %v1393
  %v1535 = vpop.f32.mrb[0].mxu0
  %v1536 = vadd.f32 %v1427, %v1535
  %v1537 = vpop.f32.mrb[0].mxu0
  %v1538 = vpop.f32.mrb[0].mxu0
  %v1539 = vadd.f32 %v1427, %v1538
  %v1540 = vpop.f32.mrb[0].mxu0
  %1541 = vmatprep.mubr.bf16.mxu0 0
  %1542 = vmatmul.mubr.bf16.gmra.mrb[0].mxu0 %v1394
  %v1543 = vpop.f32.mrb[0].mxu0
  %v1544 = vadd.f32 %v1427, %v1543
  %v1545 = vpop.f32.mrb[0].mxu0
  %v1546 = vpop.f32.mrb[0].mxu0
  %v1547 = vadd.f32 %v1427, %v1546
  %v1548 = vpop.f32.mrb[0].mxu0
  %1549 = vmatprep.mubr.bf16.mxu0 0
  %1550 = vmatmul.mubr.bf16.gmra.mrb[0].mxu0 %v1395
  %v1551 = vpop.f32.mrb[0].mxu0
  %v1552 = vadd.f32 %v1427, %v1551
  %v1553 = vpop.f32.mrb[0].mxu0
  %v1554 = vpop.f32.mrb[0].mxu0
  %v1555 = vadd.f32 %v1427, %v1554
  %v1556 = vpop.f32.mrb[0].mxu0
  %1557 = vmatprep.mubr.bf16.mxu0 0
  %1558 = vmatmul.mubr.bf16.gmra.mrb[0].mxu0 %v1396
  %v1559 = vpop.f32.mrb[0].mxu0
  %v1560 = vadd.f32 %v1427, %v1559
  %v1561 = vpop.f32.mrb[0].mxu0
  %v1562 = vpop.f32.mrb[0].mxu0
  %v1563 = vadd.f32 %v1427, %v1562
  %v1564 = vpop.f32.mrb[0].mxu0
  %1565 = vmatprep.mubr.bf16.mxu0 0
  %1566 = vmatmul.mubr.bf16.gmra.mrb[0].mxu0 %v1397
  %v1567 = vpop.f32.mrb[0].mxu0
  %v1568 = vadd.f32 %v1427, %v1567
  %v1569 = vpop.f32.mrb[0].mxu0
  %v1570 = vpop.f32.mrb[0].mxu0
  %v1571 = vadd.f32 %v1427, %v1570
  %v1572 = vpop.f32.mrb[0].mxu0
  %1573 = vmatprep.mubr.bf16.mxu0 0
  %1574 = vmatmul.mubr.bf16.gmra.mrb[0].mxu0 %v1398
  %v1575 = vpop.f32.mrb[0].mxu0
  %v1576 = vadd.f32 %v1427, %v1575
  %v1577 = vpop.f32.mrb[0].mxu0
  %v1578 = vpop.f32.mrb[0].mxu0
  %v1579 = vadd.f32 %v1427, %v1578
  %v1580 = vpop.f32.mrb[0].mxu0
  %1581 = vmatprep.mubr.bf16.mxu0 0
  %1582 = vmatmul.mubr.bf16.gmra.mrb[0].mxu0 %v1399
  %v1583 = vpop.f32.mrb[0].mxu0
  %v1584 = vadd.f32 %v1427, %v1583
  %v1585 = vpop.f32.mrb[0].mxu0
  %v1586 = vpop.f32.mrb[0].mxu0
  %v1587 = vadd.f32 %v1427, %v1586
  %v1588 = vpop.f32.mrb[0].mxu0
  %1589 = vmatprep.mubr.bf16.mxu0 0
  %1590 = vmatmul.mubr.bf16.gmra.mrb[0].mxu0 %v1400
  %v1591 = vpop.f32.mrb[0].mxu0
  %v1592 = vadd.f32 %v1427, %v1591
  %v1593 = vpop.f32.mrb[0].mxu0
  %v1594 = vpop.f32.mrb[0].mxu0
  %v1595 = vadd.f32 %v1427, %v1594
  %v1596 = vpop.f32.mrb[0].mxu0
  %1597 = vmatprep.mubr.bf16.mxu0 0
  %1598 = vmatmul.mubr.bf16.gmra.mrb[0].mxu0 %v1401
  %v1599 = vpop.f32.mrb[0].mxu0
  %v1600 = vadd.f32 %v1427, %v1599
  %v1601 = vpop.f32.mrb[0].mxu0
  %v1602 = vpop.f32.mrb[0].mxu0
  %v1603 = vadd.f32 %v1427, %v1602
  %v1604 = vpop.f32.mrb[0].mxu0
  %1605 = vmatprep.mubr.bf16.mxu0 0
  %1606 = vmatmul.mubr.bf16.gmra.mrb[0].mxu0 %v1402
  %v1607 = vpop.f32.mrb[0].mxu0
  %v1608 = vadd.f32 %v1427, %v1607
  %v1609 = vpop.f32.mrb[0].mxu0
  %v1610 = vpop.f32.mrb[0].mxu0
  %v1611 = vadd.f32 %v1427, %v1610
  %v1612 = vpop.f32.mrb[0].mxu0
  %1613 = vmatprep.mubr.bf16.mxu0 0
  %1614 = vmatmul.mubr.bf16.gmra.mrb[0].mxu0 %v1403
  %v1615 = vpop.f32.mrb[0].mxu0
  %v1616 = vadd.f32 %v1427, %v1615
  %v1617 = vpop.f32.mrb[0].mxu0
  %v1618 = vpop.f32.mrb[0].mxu0
  %v1619 = vadd.f32 %v1427, %v1618
  %v1620 = vpop.f32.mrb[0].mxu0
  %1621 = vmatprep.mubr.bf16.mxu0 0
  %1622 = vmatmul.mubr.bf16.gmra.mrb[0].mxu0 %v1404
  %v1623 = vpop.f32.mrb[0].mxu0
  %v1624 = vadd.f32 %v1427, %v1623
  %v1625 = vpop.f32.mrb[0].mxu0
  %v1626 = vpop.f32.mrb[0].mxu0
  %v1627 = vadd.f32 %v1427, %v1626
  %v1628 = vpop.f32.mrb[0].mxu0
  %1629 = vmatprep.mubr.bf16.mxu0 0
  %1630 = vmatmul.mubr.bf16.gmra.mrb[0].mxu0 %v1405
  %v1631 = vpop.f32.mrb[0].mxu0
  %v1632 = vadd.f32 %v1427, %v1631
  %v1633 = vpop.f32.mrb[0].mxu0
  %v1634 = vpop.f32.mrb[0].mxu0
  %v1635 = vadd.f32 %v1427, %v1634
  %v1636 = vpop.f32.mrb[0].mxu0
  %1637 = vdwg.mxu0
  %v1638 = vxor.u32 %v1512, 2147483648
  %v1639 = vxor.u32 %v1515, 2147483648
  %v1640 = vxor.u32 %v1520, 2147483648
  %v1641 = vxor.u32 %v1523, 2147483648
  %v1642 = vxor.u32 %v1528, 2147483648
  %v1643 = vxor.u32 %v1531, 2147483648
  %v1644 = vxor.u32 %v1536, 2147483648
  %v1645 = vxor.u32 %v1539, 2147483648
  %v1646 = vxor.u32 %v1544, 2147483648
  %v1647 = vxor.u32 %v1547, 2147483648
  %v1648 = vxor.u32 %v1552, 2147483648
  %v1649 = vxor.u32 %v1555, 2147483648
  %v1650 = vxor.u32 %v1560, 2147483648
  %v1651 = vxor.u32 %v1563, 2147483648
  %v1652 = vxor.u32 %v1568, 2147483648
  %v1653 = vxor.u32 %v1571, 2147483648
  %v1654 = vxor.u32 %v1576, 2147483648
  %v1655 = vxor.u32 %v1579, 2147483648
  %v1656 = vxor.u32 %v1584, 2147483648
  %v1657 = vxor.u32 %v1587, 2147483648
  %v1658 = vxor.u32 %v1592, 2147483648
  %v1659 = vxor.u32 %v1595, 2147483648
  %v1660 = vxor.u32 %v1600, 2147483648
  %v1661 = vxor.u32 %v1603, 2147483648
  %v1662 = vxor.u32 %v1608, 2147483648
  %v1663 = vxor.u32 %v1611, 2147483648
  %v1664 = vxor.u32 %v1616, 2147483648
  %v1665 = vxor.u32 %v1619, 2147483648
  %v1666 = vxor.u32 %v1624, 2147483648
  %v1667 = vxor.u32 %v1627, 2147483648
  %v1668 = vxor.u32 %v1632, 2147483648
  %v1669 = vxor.u32 %v1635, 2147483648
  %v1670 = vmul.f32 %v1638, 1.442695
  %v1671 = vpow.pop %v1670
  %v1672 = vmul.f32 %v1639, 1.442695
  %v1673 = vpow.pop %v1672
  %v1674 = vmul.f32 %v1640, 1.442695
  %v1675 = vpow.pop %v1674
  %v1676 = vmul.f32 %v1641, 1.442695
  %v1677 = vpow.pop %v1676
  %v1678 = vmul.f32 %v1642, 1.442695
  %v1679 = vpow.pop %v1678
  %v1680 = vmul.f32 %v1643, 1.442695
  %v1681 = vpow.pop %v1680
  %v1682 = vmul.f32 %v1644, 1.442695
  %v1683 = vpow.pop %v1682
  %v1684 = vmul.f32 %v1645, 1.442695
  %v1685 = vpow.pop %v1684
  %v1686 = vmul.f32 %v1646, 1.442695
  %v1687 = vpow.pop %v1686
  %v1688 = vmul.f32 %v1647, 1.442695
  %v1689 = vpow.pop %v1688
  %v1690 = vmul.f32 %v1648, 1.442695
  %v1691 = vpow.pop %v1690
  %v1692 = vmul.f32 %v1649, 1.442695
  %v1693 = vpow.pop %v1692
  %v1694 = vmul.f32 %v1650, 1.442695
  %v1695 = vpow.pop %v1694
  %v1696 = vmul.f32 %v1651, 1.442695
  %v1697 = vpow.pop %v1696
  %v1698 = vmul.f32 %v1652, 1.442695
  %v1699 = vpow.pop %v1698
  %v1700 = vmul.f32 %v1653, 1.442695
  %v1701 = vpow.pop %v1700
  %v1702 = vmul.f32 %v1654, 1.442695
  %v1703 = vpow.pop %v1702
  %v1704 = vmul.f32 %v1655, 1.442695
  %v1705 = vpow.pop %v1704
  %v1706 = vmul.f32 %v1656, 1.442695
  %v1707 = vpow.pop %v1706
  %v1708 = vmul.f32 %v1657, 1.442695
  %v1709 = vpow.pop %v1708
  %v1710 = vmul.f32 %v1658, 1.442695
  %v1711 = vpow.pop %v1710
  %v1712 = vmul.f32 %v1659, 1.442695
  %v1713 = vpow.pop %v1712
  %v1714 = vmul.f32 %v1660, 1.442695
  %v1715 = vpow.pop %v1714
  %v1716 = vmul.f32 %v1661, 1.442695
  %v1717 = vpow.pop %v1716
  %v1718 = vmul.f32 %v1662, 1.442695
  %v1719 = vpow.pop %v1718
  %v1720 = vmul.f32 %v1663, 1.442695
  %v1721 = vpow.pop %v1720
  %v1722 = vmul.f32 %v1664, 1.442695
  %v1723 = vpow.pop %v1722
  %v1724 = vmul.f32 %v1665, 1.442695
  %v1725 = vpow.pop %v1724
  %v1726 = vmul.f32 %v1666, 1.442695
  %v1727 = vpow.pop %v1726
  %v1728 = vmul.f32 %v1667, 1.442695
  %v1729 = vpow.pop %v1728
  %v1730 = vmul.f32 %v1668, 1.442695
  %v1731 = vpow.pop %v1730
  %v1732 = vmul.f32 %v1669, 1.442695
  %v1733 = vpow.pop %v1732
  %v1734 = vadd.f32 %v1671, 1.0
  %v1735 = vadd.f32 %v1673, 1.0
  %v1736 = vadd.f32 %v1675, 1.0
  %v1737 = vadd.f32 %v1677, 1.0
  %v1738 = vadd.f32 %v1679, 1.0
  %v1739 = vadd.f32 %v1681, 1.0
  %v1740 = vadd.f32 %v1683, 1.0
  %v1741 = vadd.f32 %v1685, 1.0
  %v1742 = vadd.f32 %v1687, 1.0
  %v1743 = vadd.f32 %v1689, 1.0
  %v1744 = vadd.f32 %v1691, 1.0
  %v1745 = vadd.f32 %v1693, 1.0
  %v1746 = vadd.f32 %v1695, 1.0
  %v1747 = vadd.f32 %v1697, 1.0
  %v1748 = vadd.f32 %v1699, 1.0
  %v1749 = vadd.f32 %v1701, 1.0
  %v1750 = vadd.f32 %v1703, 1.0
  %v1751 = vadd.f32 %v1705, 1.0
  %v1752 = vadd.f32 %v1707, 1.0
  %v1753 = vadd.f32 %v1709, 1.0
  %v1754 = vadd.f32 %v1711, 1.0
  %v1755 = vadd.f32 %v1713, 1.0
  %v1756 = vadd.f32 %v1715, 1.0
  %v1757 = vadd.f32 %v1717, 1.0
  %v1758 = vadd.f32 %v1719, 1.0
  %v1759 = vadd.f32 %v1721, 1.0
  %v1760 = vadd.f32 %v1723, 1.0
  %v1761 = vadd.f32 %v1725, 1.0
  %v1762 = vadd.f32 %v1727, 1.0
  %v1763 = vadd.f32 %v1729, 1.0
  %v1764 = vadd.f32 %v1731, 1.0
  %v1765 = vadd.f32 %v1733, 1.0
  %v1766 = vrcp.pop %v1734
  %v1767 = vmul.f32 1.0, %v1766
  %v1768 = vrcp.pop %v1735
  %v1769 = vmul.f32 1.0, %v1768
  %v1770 = vrcp.pop %v1736
  %v1771 = vmul.f32 1.0, %v1770
  %v1772 = vrcp.pop %v1737
  %v1773 = vmul.f32 1.0, %v1772
  %v1774 = vrcp.pop %v1738
  %v1775 = vmul.f32 1.0, %v1774
  %v1776 = vrcp.pop %v1739
  %v1777 = vmul.f32 1.0, %v1776
  %v1778 = vrcp.pop %v1740
  %v1779 = vmul.f32 1.0, %v1778
  %v1780 = vrcp.pop %v1741
  %v1781 = vmul.f32 1.0, %v1780
  %v1782 = vrcp.pop %v1742
  %v1783 = vmul.f32 1.0, %v1782
  %v1784 = vrcp.pop %v1743
  %v1785 = vmul.f32 1.0, %v1784
  %v1786 = vrcp.pop %v1744
  %v1787 = vmul.f32 1.0, %v1786
  %v1788 = vrcp.pop %v1745
  %v1789 = vmul.f32 1.0, %v1788
  %v1790 = vrcp.pop %v1746
  %v1791 = vmul.f32 1.0, %v1790
  %v1792 = vrcp.pop %v1747
  %v1793 = vmul.f32 1.0, %v1792
  %v1794 = vrcp.pop %v1748
  %v1795 = vmul.f32 1.0, %v1794
  %v1796 = vrcp.pop %v1749
  %v1797 = vmul.f32 1.0, %v1796
  %v1798 = vrcp.pop %v1750
  %v1799 = vmul.f32 1.0, %v1798
  %v1800 = vrcp.pop %v1751
  %v1801 = vmul.f32 1.0, %v1800
  %v1802 = vrcp.pop %v1752
  %v1803 = vmul.f32 1.0, %v1802
  %v1804 = vrcp.pop %v1753
  %v1805 = vmul.f32 1.0, %v1804
  %v1806 = vrcp.pop %v1754
  %v1807 = vmul.f32 1.0, %v1806
  %v1808 = vrcp.pop %v1755
  %v1809 = vmul.f32 1.0, %v1808
  %v1810 = vrcp.pop %v1756
  %v1811 = vmul.f32 1.0, %v1810
  %v1812 = vrcp.pop %v1757
  %v1813 = vmul.f32 1.0, %v1812
  %v1814 = vrcp.pop %v1758
  %v1815 = vmul.f32 1.0, %v1814
  %v1816 = vrcp.pop %v1759
  %v1817 = vmul.f32 1.0, %v1816
  %v1818 = vrcp.pop %v1760
  %v1819 = vmul.f32 1.0, %v1818
  %v1820 = vrcp.pop %v1761
  %v1821 = vmul.f32 1.0, %v1820
  %v1822 = vrcp.pop %v1762
  %v1823 = vmul.f32 1.0, %v1822
  %v1824 = vrcp.pop %v1763
  %v1825 = vmul.f32 1.0, %v1824
  %v1826 = vrcp.pop %v1764
  %v1827 = vmul.f32 1.0, %v1826
  %v1828 = vrcp.pop %v1765
  %v1829 = vmul.f32 1.0, %v1828
  %v1830 = vpack.c.bf16 %v1769, %v1767
  %v1831 = vpack.c.bf16 %v1773, %v1771
  %v1832 = vpack.c.bf16 %v1777, %v1775
  %v1833 = vpack.c.bf16 %v1781, %v1779
  %v1834 = vpack.c.bf16 %v1785, %v1783
  %v1835 = vpack.c.bf16 %v1789, %v1787
  %v1836 = vpack.c.bf16 %v1793, %v1791
  %v1837 = vpack.c.bf16 %v1797, %v1795
  %v1838 = vpack.c.bf16 %v1801, %v1799
  %v1839 = vpack.c.bf16 %v1805, %v1803
  %v1840 = vpack.c.bf16 %v1809, %v1807
  %v1841 = vpack.c.bf16 %v1813, %v1811
  %v1842 = vpack.c.bf16 %v1817, %v1815
  %v1843 = vpack.c.bf16 %v1821, %v1819
  %v1844 = vpack.c.bf16 %v1825, %v1823
  %v1845 = vpack.c.bf16 %v1829, %v1827
  %v1846 = vld [vmem:[%s9] sm:$0xf]
  %v1847 = vld [vmem:[%s9 + $0x4] sm:$0xf]
  %v1848 = vld [vmem:[%s9 + $0x8] sm:$0xf]
  %v1849 = vld [vmem:[%s9 + $0xc] sm:$0xf]
  %v1850 = vld [vmem:[%s9 + $0x10] sm:$0xf]
  %v1851 = vld [vmem:[%s9 + $0x14] sm:$0xf]
  %v1852 = vld [vmem:[%s9 + $0x18] sm:$0xf]
  %v1853 = vld [vmem:[%s9 + $0x1c] sm:$0xf]
  %v1854 = vld [vmem:[%s9 + $0x20] sm:$0xf]
  %v1855 = vld [vmem:[%s9 + $0x24] sm:$0xf]
  %v1856 = vld [vmem:[%s9 + $0x28] sm:$0xf]
  %v1857 = vld [vmem:[%s9 + $0x2c] sm:$0xf]
  %v1858 = vld [vmem:[%s9 + $0x30] sm:$0xf]
  %v1859 = vld [vmem:[%s9 + $0x34] sm:$0xf]
  %v1860 = vld [vmem:[%s9 + $0x38] sm:$0xf]
  %v1861 = vld [vmem:[%s9 + $0x3c] sm:$0xf]
  %v1862 = vld [vmem:[%s10] sm:$0x1]
  %v1864 = vlaneseq
  %v1865 = vshrl.u32 %v1864, 7
  %v1866 = vsub.s32 0, %v1865
  %v1867 = vrot.slane %v1862, %v1866
  %v1885 = vunpack.c.l.b16 %v1846
  %v1886 = vunpack.c.l.b16 %v1847
  %v1887 = vunpack.c.l.b16 %v1848
  %v1888 = vunpack.c.l.b16 %v1849
  %v1889 = vunpack.c.l.b16 %v1850
  %v1890 = vunpack.c.l.b16 %v1851
  %v1891 = vunpack.c.l.b16 %v1852
  %v1892 = vunpack.c.l.b16 %v1853
  %v1893 = vunpack.c.l.b16 %v1854
  %v1894 = vunpack.c.l.b16 %v1855
  %v1895 = vunpack.c.l.b16 %v1856
  %v1896 = vunpack.c.l.b16 %v1857
  %v1897 = vunpack.c.l.b16 %v1858
  %v1898 = vunpack.c.l.b16 %v1859
  %v1899 = vunpack.c.l.b16 %v1860
  %v1900 = vunpack.c.l.b16 %v1861
  %v1901 = vpack.c.b16 %v1886, %v1885
  %v1902 = vpack.c.b16 %v1888, %v1887
  %v1903 = vpack.c.b16 %v1890, %v1889
  %v1904 = vpack.c.b16 %v1892, %v1891
  %v1905 = vpack.c.b16 %v1894, %v1893
  %v1906 = vpack.c.b16 %v1896, %v1895
  %v1907 = vpack.c.b16 %v1898, %v1897
  %v1908 = vpack.c.b16 %v1900, %v1899
  %1917 = vmatprep.subr.bf16.mxu0 0
  %1918 = vmatpush1.bf16.msra.mxu0 %v1901
  %1919 = vmatprep.subr.bf16.mxu0 0
  %1920 = vmatpush1.bf16.msra.mxu0 %v1902
  %1921 = vmatprep.subr.bf16.mxu0 0
  %1922 = vmatpush1.bf16.msra.mxu0 %v1903
  %1923 = vmatprep.subr.bf16.mxu0 0
  %1924 = vmatpush1.bf16.msra.mxu0 %v1904
  %1925 = vmatprep.subr.bf16.mxu0 0
  %1926 = vmatpush1.bf16.msra.mxu0 %v1905
  %1927 = vmatprep.subr.bf16.mxu0 0
  %1928 = vmatpush1.bf16.msra.mxu0 %v1906
  %1929 = vmatprep.subr.bf16.mxu0 0
  %1930 = vmatpush1.bf16.msra.mxu0 %v1907
  %1931 = vmatprep.subr.bf16.mxu0 0
  %1932 = vmatpush1.bf16.msra.mxu0 %v1908
  %1933 = vmatprep.subr.bf16.mxu0 0
  %1934 = vmatpush1.bf16.msra.mxu0 0
  %1935 = vmatprep.subr.bf16.mxu0 0
  %1936 = vmatpush1.bf16.msra.mxu0 0
  %1937 = vmatprep.subr.bf16.mxu0 0
  %1938 = vmatpush1.bf16.msra.mxu0 0
  %1939 = vmatprep.subr.bf16.mxu0 0
  %1940 = vmatpush1.bf16.msra.mxu0 0
  %1941 = vmatprep.subr.bf16.mxu0 0
  %1942 = vmatpush1.bf16.msra.mxu0 0
  %1943 = vmatprep.subr.bf16.mxu0 0
  %1944 = vmatpush1.bf16.msra.mxu0 0
  %1945 = vmatprep.subr.bf16.mxu0 0
  %1946 = vmatpush1.bf16.msra.mxu0 0
  %1947 = vmatprep.subr.bf16.mxu0 0
  %1948 = vmatpush1.bf16.msra.mxu0 0
  %1949 = vmatprep.mubr.bf16.mxu0 0
  %1950 = vmatmul.mubr.bf16.gmra.mrb[0].mxu0 %v1830
  %v1951 = vpop.f32.mrb[0].mxu0
  %v1952 = vadd.f32 %v1867, %v1951
  %v1953 = vpop.f32.mrb[0].mxu0
  %v1954 = vpop.f32.mrb[0].mxu0
  %v1955 = vadd.f32 %v1867, %v1954
  %v1956 = vpop.f32.mrb[0].mxu0
  %1957 = vmatprep.mubr.bf16.mxu0 0
  %1958 = vmatmul.mubr.bf16.gmra.mrb[0].mxu0 %v1831
  %v1959 = vpop.f32.mrb[0].mxu0
  %v1960 = vadd.f32 %v1867, %v1959
  %v1961 = vpop.f32.mrb[0].mxu0
  %v1962 = vpop.f32.mrb[0].mxu0
  %v1963 = vadd.f32 %v1867, %v1962
  %v1964 = vpop.f32.mrb[0].mxu0
  %1965 = vmatprep.mubr.bf16.mxu0 0
  %1966 = vmatmul.mubr.bf16.gmra.mrb[0].mxu0 %v1832
  %v1967 = vpop.f32.mrb[0].mxu0
  %v1968 = vadd.f32 %v1867, %v1967
  %v1969 = vpop.f32.mrb[0].mxu0
  %v1970 = vpop.f32.mrb[0].mxu0
  %v1971 = vadd.f32 %v1867, %v1970
  %v1972 = vpop.f32.mrb[0].mxu0
  %1973 = vmatprep.mubr.bf16.mxu0 0
  %1974 = vmatmul.mubr.bf16.gmra.mrb[0].mxu0 %v1833
  %v1975 = vpop.f32.mrb[0].mxu0
  %v1976 = vadd.f32 %v1867, %v1975
  %v1977 = vpop.f32.mrb[0].mxu0
  %v1978 = vpop.f32.mrb[0].mxu0
  %v1979 = vadd.f32 %v1867, %v1978
  %v1980 = vpop.f32.mrb[0].mxu0
  %1981 = vmatprep.mubr.bf16.mxu0 0
  %1982 = vmatmul.mubr.bf16.gmra.mrb[0].mxu0 %v1834
  %v1983 = vpop.f32.mrb[0].mxu0
  %v1984 = vadd.f32 %v1867, %v1983
  %v1985 = vpop.f32.mrb[0].mxu0
  %v1986 = vpop.f32.mrb[0].mxu0
  %v1987 = vadd.f32 %v1867, %v1986
  %v1988 = vpop.f32.mrb[0].mxu0
  %1989 = vmatprep.mubr.bf16.mxu0 0
  %1990 = vmatmul.mubr.bf16.gmra.mrb[0].mxu0 %v1835
  %v1991 = vpop.f32.mrb[0].mxu0
  %v1992 = vadd.f32 %v1867, %v1991
  %v1993 = vpop.f32.mrb[0].mxu0
  %v1994 = vpop.f32.mrb[0].mxu0
  %v1995 = vadd.f32 %v1867, %v1994
  %v1996 = vpop.f32.mrb[0].mxu0
  %1997 = vmatprep.mubr.bf16.mxu0 0
  %1998 = vmatmul.mubr.bf16.gmra.mrb[0].mxu0 %v1836
  %v1999 = vpop.f32.mrb[0].mxu0
  %v2000 = vadd.f32 %v1867, %v1999
  %v2001 = vpop.f32.mrb[0].mxu0
  %v2002 = vpop.f32.mrb[0].mxu0
  %v2003 = vadd.f32 %v1867, %v2002
  %v2004 = vpop.f32.mrb[0].mxu0
  %2005 = vmatprep.mubr.bf16.mxu0 0
  %2006 = vmatmul.mubr.bf16.gmra.mrb[0].mxu0 %v1837
  %v2007 = vpop.f32.mrb[0].mxu0
  %v2008 = vadd.f32 %v1867, %v2007
  %v2009 = vpop.f32.mrb[0].mxu0
  %v2010 = vpop.f32.mrb[0].mxu0
  %v2011 = vadd.f32 %v1867, %v2010
  %v2012 = vpop.f32.mrb[0].mxu0
  %2013 = vmatprep.mubr.bf16.mxu0 0
  %2014 = vmatmul.mubr.bf16.gmra.mrb[0].mxu0 %v1838
  %v2015 = vpop.f32.mrb[0].mxu0
  %v2016 = vadd.f32 %v1867, %v2015
  %v2017 = vpop.f32.mrb[0].mxu0
  %v2018 = vpop.f32.mrb[0].mxu0
  %v2019 = vadd.f32 %v1867, %v2018
  %v2020 = vpop.f32.mrb[0].mxu0
  %2021 = vmatprep.mubr.bf16.mxu0 0
  %2022 = vmatmul.mubr.bf16.gmra.mrb[0].mxu0 %v1839
  %v2023 = vpop.f32.mrb[0].mxu0
  %v2024 = vadd.f32 %v1867, %v2023
  %v2025 = vpop.f32.mrb[0].mxu0
  %v2026 = vpop.f32.mrb[0].mxu0
  %v2027 = vadd.f32 %v1867, %v2026
  %v2028 = vpop.f32.mrb[0].mxu0
  %2029 = vmatprep.mubr.bf16.mxu0 0
  %2030 = vmatmul.mubr.bf16.gmra.mrb[0].mxu0 %v1840
  %v2031 = vpop.f32.mrb[0].mxu0
  %v2032 = vadd.f32 %v1867, %v2031
  %v2033 = vpop.f32.mrb[0].mxu0
  %v2034 = vpop.f32.mrb[0].mxu0
  %v2035 = vadd.f32 %v1867, %v2034
  %v2036 = vpop.f32.mrb[0].mxu0
  %2037 = vmatprep.mubr.bf16.mxu0 0
  %2038 = vmatmul.mubr.bf16.gmra.mrb[0].mxu0 %v1841
  %v2039 = vpop.f32.mrb[0].mxu0
  %v2040 = vadd.f32 %v1867, %v2039
  %v2041 = vpop.f32.mrb[0].mxu0
  %v2042 = vpop.f32.mrb[0].mxu0
  %v2043 = vadd.f32 %v1867, %v2042
  %v2044 = vpop.f32.mrb[0].mxu0
  %2045 = vmatprep.mubr.bf16.mxu0 0
  %2046 = vmatmul.mubr.bf16.gmra.mrb[0].mxu0 %v1842
  %v2047 = vpop.f32.mrb[0].mxu0
  %v2048 = vadd.f32 %v1867, %v2047
  %v2049 = vpop.f32.mrb[0].mxu0
  %v2050 = vpop.f32.mrb[0].mxu0
  %v2051 = vadd.f32 %v1867, %v2050
  %v2052 = vpop.f32.mrb[0].mxu0
  %2053 = vmatprep.mubr.bf16.mxu0 0
  %2054 = vmatmul.mubr.bf16.gmra.mrb[0].mxu0 %v1843
  %v2055 = vpop.f32.mrb[0].mxu0
  %v2056 = vadd.f32 %v1867, %v2055
  %v2057 = vpop.f32.mrb[0].mxu0
  %v2058 = vpop.f32.mrb[0].mxu0
  %v2059 = vadd.f32 %v1867, %v2058
  %v2060 = vpop.f32.mrb[0].mxu0
  %2061 = vmatprep.mubr.bf16.mxu0 0
  %2062 = vmatmul.mubr.bf16.gmra.mrb[0].mxu0 %v1844
  %v2063 = vpop.f32.mrb[0].mxu0
  %v2064 = vadd.f32 %v1867, %v2063
  %v2065 = vpop.f32.mrb[0].mxu0
  %v2066 = vpop.f32.mrb[0].mxu0
  %v2067 = vadd.f32 %v1867, %v2066
  %v2068 = vpop.f32.mrb[0].mxu0
  %2069 = vmatprep.mubr.bf16.mxu0 0
  %2070 = vmatmul.mubr.bf16.gmra.mrb[0].mxu0 %v1845
  %v2071 = vpop.f32.mrb[0].mxu0
  %v2072 = vadd.f32 %v1867, %v2071
  %v2073 = vpop.f32.mrb[0].mxu0
  %v2074 = vpop.f32.mrb[0].mxu0
  %v2075 = vadd.f32 %v1867, %v2074
  %v2076 = vpop.f32.mrb[0].mxu0
  %2077 = vdwg.mxu0
  %vm2078 = vcmp.ge.f32.partialorder %v1952, 0.0
  %vm2079 = vcmp.ge.f32.partialorder %v1955, 0.0
  %vm2080 = vcmp.ge.f32.partialorder %v1960, 0.0
  %vm2081 = vcmp.ge.f32.partialorder %v1963, 0.0
  %vm2082 = vcmp.ge.f32.partialorder %v1968, 0.0
  %vm2083 = vcmp.ge.f32.partialorder %v1971, 0.0
  %vm2084 = vcmp.ge.f32.partialorder %v1976, 0.0
  %vm2085 = vcmp.ge.f32.partialorder %v1979, 0.0
  %vm2086 = vcmp.ge.f32.partialorder %v1984, 0.0
  %vm2087 = vcmp.ge.f32.partialorder %v1987, 0.0
  %vm2088 = vcmp.ge.f32.partialorder %v1992, 0.0
  %vm2089 = vcmp.ge.f32.partialorder %v1995, 0.0
  %vm2090 = vcmp.ge.f32.partialorder %v2000, 0.0
  %vm2091 = vcmp.ge.f32.partialorder %v2003, 0.0
  %vm2092 = vcmp.ge.f32.partialorder %v2008, 0.0
  %vm2093 = vcmp.ge.f32.partialorder %v2011, 0.0
  %vm2094 = vcmp.ge.f32.partialorder %v2016, 0.0
  %vm2095 = vcmp.ge.f32.partialorder %v2019, 0.0
  %vm2096 = vcmp.ge.f32.partialorder %v2024, 0.0
  %vm2097 = vcmp.ge.f32.partialorder %v2027, 0.0
  %vm2098 = vcmp.ge.f32.partialorder %v2032, 0.0
  %vm2099 = vcmp.ge.f32.partialorder %v2035, 0.0
  %vm2100 = vcmp.ge.f32.partialorder %v2040, 0.0
  %vm2101 = vcmp.ge.f32.partialorder %v2043, 0.0
  %vm2102 = vcmp.ge.f32.partialorder %v2048, 0.0
  %vm2103 = vcmp.ge.f32.partialorder %v2051, 0.0
  %vm2104 = vcmp.ge.f32.partialorder %v2056, 0.0
  %vm2105 = vcmp.ge.f32.partialorder %v2059, 0.0
  %vm2106 = vcmp.ge.f32.partialorder %v2064, 0.0
  %vm2107 = vcmp.ge.f32.partialorder %v2067, 0.0
  %vm2108 = vcmp.ge.f32.partialorder %v2072, 0.0
  %vm2109 = vcmp.ge.f32.partialorder %v2075, 0.0
  %v2110 = vmul.f32 %v1952, 0.01
  %v2111 = vmul.f32 %v1955, 0.01
  %v2112 = vmul.f32 %v1960, 0.01
  %v2113 = vmul.f32 %v1963, 0.01
  %v2114 = vmul.f32 %v1968, 0.01
  %v2115 = vmul.f32 %v1971, 0.01
  %v2116 = vmul.f32 %v1976, 0.01
  %v2117 = vmul.f32 %v1979, 0.01
  %v2118 = vmul.f32 %v1984, 0.01
  %v2119 = vmul.f32 %v1987, 0.01
  %v2120 = vmul.f32 %v1992, 0.01
  %v2121 = vmul.f32 %v1995, 0.01
  %v2122 = vmul.f32 %v2000, 0.01
  %v2123 = vmul.f32 %v2003, 0.01
  %v2124 = vmul.f32 %v2008, 0.01
  %v2125 = vmul.f32 %v2011, 0.01
  %v2126 = vmul.f32 %v2016, 0.01
  %v2127 = vmul.f32 %v2019, 0.01
  %v2128 = vmul.f32 %v2024, 0.01
  %v2129 = vmul.f32 %v2027, 0.01
  %v2130 = vmul.f32 %v2032, 0.01
  %v2131 = vmul.f32 %v2035, 0.01
  %v2132 = vmul.f32 %v2040, 0.01
  %v2133 = vmul.f32 %v2043, 0.01
  %v2134 = vmul.f32 %v2048, 0.01
  %v2135 = vmul.f32 %v2051, 0.01
  %v2136 = vmul.f32 %v2056, 0.01
  %v2137 = vmul.f32 %v2059, 0.01
  %v2138 = vmul.f32 %v2064, 0.01
  %v2139 = vmul.f32 %v2067, 0.01
  %v2140 = vmul.f32 %v2072, 0.01
  %v2141 = vmul.f32 %v2075, 0.01
  %v2142 = vsel %vm2078, %v1952, %v2110
  %v2143 = vsel %vm2079, %v1955, %v2111
  %v2144 = vsel %vm2080, %v1960, %v2112
  %v2145 = vsel %vm2081, %v1963, %v2113
  %v2146 = vsel %vm2082, %v1968, %v2114
  %v2147 = vsel %vm2083, %v1971, %v2115
  %v2148 = vsel %vm2084, %v1976, %v2116
  %v2149 = vsel %vm2085, %v1979, %v2117
  %v2150 = vsel %vm2086, %v1984, %v2118
  %v2151 = vsel %vm2087, %v1987, %v2119
  %v2152 = vsel %vm2088, %v1992, %v2120
  %v2153 = vsel %vm2089, %v1995, %v2121
  %v2154 = vsel %vm2090, %v2000, %v2122
  %v2155 = vsel %vm2091, %v2003, %v2123
  %v2156 = vsel %vm2092, %v2008, %v2124
  %v2157 = vsel %vm2093, %v2011, %v2125
  %v2158 = vsel %vm2094, %v2016, %v2126
  %v2159 = vsel %vm2095, %v2019, %v2127
  %v2160 = vsel %vm2096, %v2024, %v2128
  %v2161 = vsel %vm2097, %v2027, %v2129
  %v2162 = vsel %vm2098, %v2032, %v2130
  %v2163 = vsel %vm2099, %v2035, %v2131
  %v2164 = vsel %vm2100, %v2040, %v2132
  %v2165 = vsel %vm2101, %v2043, %v2133
  %v2166 = vsel %vm2102, %v2048, %v2134
  %v2167 = vsel %vm2103, %v2051, %v2135
  %v2168 = vsel %vm2104, %v2056, %v2136
  %v2169 = vsel %vm2105, %v2059, %v2137
  %v2170 = vsel %vm2106, %v2064, %v2138
  %v2171 = vsel %vm2107, %v2067, %v2139
  %v2172 = vsel %vm2108, %v2072, %v2140
  %v2173 = vsel %vm2109, %v2075, %v2141
  %v2174 = vlaneseq
  %v2175 = vand.u32 %v2174, 127
  %vm2176 = vcmp.lt.s32.totalorder %v2175, 9
  %v2177 = vsel %vm2176, %v2142, -1e+30
  %v2178 = vsel %vm2176, %v2143, -1e+30
  %v2179 = vsel %vm2176, %v2144, -1e+30
  %v2180 = vsel %vm2176, %v2145, -1e+30
  %v2181 = vsel %vm2176, %v2146, -1e+30
  %v2182 = vsel %vm2176, %v2147, -1e+30
  %v2183 = vsel %vm2176, %v2148, -1e+30
  %v2184 = vsel %vm2176, %v2149, -1e+30
  %v2185 = vsel %vm2176, %v2150, -1e+30
  %v2186 = vsel %vm2176, %v2151, -1e+30
  %v2187 = vsel %vm2176, %v2152, -1e+30
  %v2188 = vsel %vm2176, %v2153, -1e+30
  %v2189 = vsel %vm2176, %v2154, -1e+30
  %v2190 = vsel %vm2176, %v2155, -1e+30
  %v2191 = vsel %vm2176, %v2156, -1e+30
  %v2192 = vsel %vm2176, %v2157, -1e+30
  %v2193 = vsel %vm2176, %v2158, -1e+30
  %v2194 = vsel %vm2176, %v2159, -1e+30
  %v2195 = vsel %vm2176, %v2160, -1e+30
  %v2196 = vsel %vm2176, %v2161, -1e+30
  %v2197 = vsel %vm2176, %v2162, -1e+30
  %v2198 = vsel %vm2176, %v2163, -1e+30
  %v2199 = vsel %vm2176, %v2164, -1e+30
  %v2200 = vsel %vm2176, %v2165, -1e+30
  %v2201 = vsel %vm2176, %v2166, -1e+30
  %v2202 = vsel %vm2176, %v2167, -1e+30
  %v2203 = vsel %vm2176, %v2168, -1e+30
  %v2204 = vsel %vm2176, %v2169, -1e+30
  %v2205 = vsel %vm2176, %v2170, -1e+30
  %v2206 = vsel %vm2176, %v2171, -1e+30
  %v2207 = vsel %vm2176, %v2172, -1e+30
  %v2208 = vsel %vm2176, %v2173, -1e+30
  %2209 = vmax.xlane.f32.xlu0 %v2177
  %v2210 = vpop.xlane.xlu0 %2209
  %2211 = vmax.xlane.f32.xlu0 %v2178
  %v2212 = vpop.xlane.xlu0 %2211
  %2213 = vmax.xlane.f32.xlu0 %v2179
  %v2214 = vpop.xlane.xlu0 %2213
  %2215 = vmax.xlane.f32.xlu0 %v2180
  %v2216 = vpop.xlane.xlu0 %2215
  %2217 = vmax.xlane.f32.xlu0 %v2181
  %v2218 = vpop.xlane.xlu0 %2217
  %2219 = vmax.xlane.f32.xlu0 %v2182
  %v2220 = vpop.xlane.xlu0 %2219
  %2221 = vmax.xlane.f32.xlu0 %v2183
  %v2222 = vpop.xlane.xlu0 %2221
  %2223 = vmax.xlane.f32.xlu0 %v2184
  %v2224 = vpop.xlane.xlu0 %2223
  %2225 = vmax.xlane.f32.xlu0 %v2185
  %v2226 = vpop.xlane.xlu0 %2225
  %2227 = vmax.xlane.f32.xlu0 %v2186
  %v2228 = vpop.xlane.xlu0 %2227
  %2229 = vmax.xlane.f32.xlu0 %v2187
  %v2230 = vpop.xlane.xlu0 %2229
  %2231 = vmax.xlane.f32.xlu0 %v2188
  %v2232 = vpop.xlane.xlu0 %2231
  %2233 = vmax.xlane.f32.xlu0 %v2189
  %v2234 = vpop.xlane.xlu0 %2233
  %2235 = vmax.xlane.f32.xlu0 %v2190
  %v2236 = vpop.xlane.xlu0 %2235
  %2237 = vmax.xlane.f32.xlu0 %v2191
  %v2238 = vpop.xlane.xlu0 %2237
  %2239 = vmax.xlane.f32.xlu0 %v2192
  %v2240 = vpop.xlane.xlu0 %2239
  %2241 = vmax.xlane.f32.xlu0 %v2193
  %v2242 = vpop.xlane.xlu0 %2241
  %2243 = vmax.xlane.f32.xlu0 %v2194
  %v2244 = vpop.xlane.xlu0 %2243
  %2245 = vmax.xlane.f32.xlu0 %v2195
  %v2246 = vpop.xlane.xlu0 %2245
  %2247 = vmax.xlane.f32.xlu0 %v2196
  %v2248 = vpop.xlane.xlu0 %2247
  %2249 = vmax.xlane.f32.xlu0 %v2197
  %v2250 = vpop.xlane.xlu0 %2249
  %2251 = vmax.xlane.f32.xlu0 %v2198
  %v2252 = vpop.xlane.xlu0 %2251
  %2253 = vmax.xlane.f32.xlu0 %v2199
  %v2254 = vpop.xlane.xlu0 %2253
  %2255 = vmax.xlane.f32.xlu0 %v2200
  %v2256 = vpop.xlane.xlu0 %2255
  %2257 = vmax.xlane.f32.xlu0 %v2201
  %v2258 = vpop.xlane.xlu0 %2257
  %2259 = vmax.xlane.f32.xlu0 %v2202
  %v2260 = vpop.xlane.xlu0 %2259
  %2261 = vmax.xlane.f32.xlu0 %v2203
  %v2262 = vpop.xlane.xlu0 %2261
  %2263 = vmax.xlane.f32.xlu0 %v2204
  %v2264 = vpop.xlane.xlu0 %2263
  %2265 = vmax.xlane.f32.xlu0 %v2205
  %v2266 = vpop.xlane.xlu0 %2265
  %2267 = vmax.xlane.f32.xlu0 %v2206
  %v2268 = vpop.xlane.xlu0 %2267
  %2269 = vmax.xlane.f32.xlu0 %v2207
  %v2270 = vpop.xlane.xlu0 %2269
  %2271 = vmax.xlane.f32.xlu0 %v2208
  %v2272 = vpop.xlane.xlu0 %2271
  %v2273 = vsub.f32 %v2177, %v2210
  %v2274 = vsub.f32 %v2178, %v2212
  %v2275 = vsub.f32 %v2179, %v2214
  %v2276 = vsub.f32 %v2180, %v2216
  %v2277 = vsub.f32 %v2181, %v2218
  %v2278 = vsub.f32 %v2182, %v2220
  %v2279 = vsub.f32 %v2183, %v2222
  %v2280 = vsub.f32 %v2184, %v2224
  %v2281 = vsub.f32 %v2185, %v2226
  %v2282 = vsub.f32 %v2186, %v2228
  %v2283 = vsub.f32 %v2187, %v2230
  %v2284 = vsub.f32 %v2188, %v2232
  %v2285 = vsub.f32 %v2189, %v2234
  %v2286 = vsub.f32 %v2190, %v2236
  %v2287 = vsub.f32 %v2191, %v2238
  %v2288 = vsub.f32 %v2192, %v2240
  %v2289 = vsub.f32 %v2193, %v2242
  %v2290 = vsub.f32 %v2194, %v2244
  %v2291 = vsub.f32 %v2195, %v2246
  %v2292 = vsub.f32 %v2196, %v2248
  %v2293 = vsub.f32 %v2197, %v2250
  %v2294 = vsub.f32 %v2198, %v2252
  %v2295 = vsub.f32 %v2199, %v2254
  %v2296 = vsub.f32 %v2200, %v2256
  %v2297 = vsub.f32 %v2201, %v2258
  %v2298 = vsub.f32 %v2202, %v2260
  %v2299 = vsub.f32 %v2203, %v2262
  %v2300 = vsub.f32 %v2204, %v2264
  %v2301 = vsub.f32 %v2205, %v2266
  %v2302 = vsub.f32 %v2206, %v2268
  %v2303 = vsub.f32 %v2207, %v2270
  %v2304 = vsub.f32 %v2208, %v2272
  %v2305 = vmul.f32 %v2273, 1.442695
  %v2306 = vpow.pop %v2305
  %v2307 = vmul.f32 %v2274, 1.442695
  %v2308 = vpow.pop %v2307
  %v2309 = vmul.f32 %v2275, 1.442695
  %v2310 = vpow.pop %v2309
  %v2311 = vmul.f32 %v2276, 1.442695
  %v2312 = vpow.pop %v2311
  %v2313 = vmul.f32 %v2277, 1.442695
  %v2314 = vpow.pop %v2313
  %v2315 = vmul.f32 %v2278, 1.442695
  %v2316 = vpow.pop %v2315
  %v2317 = vmul.f32 %v2279, 1.442695
  %v2318 = vpow.pop %v2317
  %v2319 = vmul.f32 %v2280, 1.442695
  %v2320 = vpow.pop %v2319
  %v2321 = vmul.f32 %v2281, 1.442695
  %v2322 = vpow.pop %v2321
  %v2323 = vmul.f32 %v2282, 1.442695
  %v2324 = vpow.pop %v2323
  %v2325 = vmul.f32 %v2283, 1.442695
  %v2326 = vpow.pop %v2325
  %v2327 = vmul.f32 %v2284, 1.442695
  %v2328 = vpow.pop %v2327
  %v2329 = vmul.f32 %v2285, 1.442695
  %v2330 = vpow.pop %v2329
  %v2331 = vmul.f32 %v2286, 1.442695
  %v2332 = vpow.pop %v2331
  %v2333 = vmul.f32 %v2287, 1.442695
  %v2334 = vpow.pop %v2333
  %v2335 = vmul.f32 %v2288, 1.442695
  %v2336 = vpow.pop %v2335
  %v2337 = vmul.f32 %v2289, 1.442695
  %v2338 = vpow.pop %v2337
  %v2339 = vmul.f32 %v2290, 1.442695
  %v2340 = vpow.pop %v2339
  %v2341 = vmul.f32 %v2291, 1.442695
  %v2342 = vpow.pop %v2341
  %v2343 = vmul.f32 %v2292, 1.442695
  %v2344 = vpow.pop %v2343
  %v2345 = vmul.f32 %v2293, 1.442695
  %v2346 = vpow.pop %v2345
  %v2347 = vmul.f32 %v2294, 1.442695
  %v2348 = vpow.pop %v2347
  %v2349 = vmul.f32 %v2295, 1.442695
  %v2350 = vpow.pop %v2349
  %v2351 = vmul.f32 %v2296, 1.442695
  %v2352 = vpow.pop %v2351
  %v2353 = vmul.f32 %v2297, 1.442695
  %v2354 = vpow.pop %v2353
  %v2355 = vmul.f32 %v2298, 1.442695
  %v2356 = vpow.pop %v2355
  %v2357 = vmul.f32 %v2299, 1.442695
  %v2358 = vpow.pop %v2357
  %v2359 = vmul.f32 %v2300, 1.442695
  %v2360 = vpow.pop %v2359
  %v2361 = vmul.f32 %v2301, 1.442695
  %v2362 = vpow.pop %v2361
  %v2363 = vmul.f32 %v2302, 1.442695
  %v2364 = vpow.pop %v2363
  %v2365 = vmul.f32 %v2303, 1.442695
  %v2366 = vpow.pop %v2365
  %v2367 = vmul.f32 %v2304, 1.442695
  %v2368 = vpow.pop %v2367
  %2369 = vadd.xlane.f32.xlu0 %v2306
  %v2370 = vpop.xlane.xlu0 %2369
  %2371 = vadd.xlane.f32.xlu0 %v2308
  %v2372 = vpop.xlane.xlu0 %2371
  %2373 = vadd.xlane.f32.xlu0 %v2310
  %v2374 = vpop.xlane.xlu0 %2373
  %2375 = vadd.xlane.f32.xlu0 %v2312
  %v2376 = vpop.xlane.xlu0 %2375
  %2377 = vadd.xlane.f32.xlu0 %v2314
  %v2378 = vpop.xlane.xlu0 %2377
  %2379 = vadd.xlane.f32.xlu0 %v2316
  %v2380 = vpop.xlane.xlu0 %2379
  %2381 = vadd.xlane.f32.xlu0 %v2318
  %v2382 = vpop.xlane.xlu0 %2381
  %2383 = vadd.xlane.f32.xlu0 %v2320
  %v2384 = vpop.xlane.xlu0 %2383
  %2385 = vadd.xlane.f32.xlu0 %v2322
  %v2386 = vpop.xlane.xlu0 %2385
  %2387 = vadd.xlane.f32.xlu0 %v2324
  %v2388 = vpop.xlane.xlu0 %2387
  %2389 = vadd.xlane.f32.xlu0 %v2326
  %v2390 = vpop.xlane.xlu0 %2389
  %2391 = vadd.xlane.f32.xlu0 %v2328
  %v2392 = vpop.xlane.xlu0 %2391
  %2393 = vadd.xlane.f32.xlu0 %v2330
  %v2394 = vpop.xlane.xlu0 %2393
  %2395 = vadd.xlane.f32.xlu0 %v2332
  %v2396 = vpop.xlane.xlu0 %2395
  %2397 = vadd.xlane.f32.xlu0 %v2334
  %v2398 = vpop.xlane.xlu0 %2397
  %2399 = vadd.xlane.f32.xlu0 %v2336
  %v2400 = vpop.xlane.xlu0 %2399
  %2401 = vadd.xlane.f32.xlu0 %v2338
  %v2402 = vpop.xlane.xlu0 %2401
  %2403 = vadd.xlane.f32.xlu0 %v2340
  %v2404 = vpop.xlane.xlu0 %2403
  %2405 = vadd.xlane.f32.xlu0 %v2342
  %v2406 = vpop.xlane.xlu0 %2405
  %2407 = vadd.xlane.f32.xlu0 %v2344
  %v2408 = vpop.xlane.xlu0 %2407
  %2409 = vadd.xlane.f32.xlu0 %v2346
  %v2410 = vpop.xlane.xlu0 %2409
  %2411 = vadd.xlane.f32.xlu0 %v2348
  %v2412 = vpop.xlane.xlu0 %2411
  %2413 = vadd.xlane.f32.xlu0 %v2350
  %v2414 = vpop.xlane.xlu0 %2413
  %2415 = vadd.xlane.f32.xlu0 %v2352
  %v2416 = vpop.xlane.xlu0 %2415
  %2417 = vadd.xlane.f32.xlu0 %v2354
  %v2418 = vpop.xlane.xlu0 %2417
  %2419 = vadd.xlane.f32.xlu0 %v2356
  %v2420 = vpop.xlane.xlu0 %2419
  %2421 = vadd.xlane.f32.xlu0 %v2358
  %v2422 = vpop.xlane.xlu0 %2421
  %2423 = vadd.xlane.f32.xlu0 %v2360
  %v2424 = vpop.xlane.xlu0 %2423
  %2425 = vadd.xlane.f32.xlu0 %v2362
  %v2426 = vpop.xlane.xlu0 %2425
  %2427 = vadd.xlane.f32.xlu0 %v2364
  %v2428 = vpop.xlane.xlu0 %2427
  %2429 = vadd.xlane.f32.xlu0 %v2366
  %v2430 = vpop.xlane.xlu0 %2429
  %2431 = vadd.xlane.f32.xlu0 %v2368
  %v2432 = vpop.xlane.xlu0 %2431
  %v2433 = vrcp.pop %v2370
  %v2434 = vrcp.pop %v2372
  %v2435 = vrcp.pop %v2374
  %v2436 = vrcp.pop %v2376
  %v2437 = vrcp.pop %v2378
  %v2438 = vrcp.pop %v2380
  %v2439 = vrcp.pop %v2382
  %v2440 = vrcp.pop %v2384
  %v2441 = vrcp.pop %v2386
  %v2442 = vrcp.pop %v2388
  %v2443 = vrcp.pop %v2390
  %v2444 = vrcp.pop %v2392
  %v2445 = vrcp.pop %v2394
  %v2446 = vrcp.pop %v2396
  %v2447 = vrcp.pop %v2398
  %v2448 = vrcp.pop %v2400
  %v2449 = vrcp.pop %v2402
  %v2450 = vrcp.pop %v2404
  %v2451 = vrcp.pop %v2406
  %v2452 = vrcp.pop %v2408
  %v2453 = vrcp.pop %v2410
  %v2454 = vrcp.pop %v2412
  %v2455 = vrcp.pop %v2414
  %v2456 = vrcp.pop %v2416
  %v2457 = vrcp.pop %v2418
  %v2458 = vrcp.pop %v2420
  %v2459 = vrcp.pop %v2422
  %v2460 = vrcp.pop %v2424
  %v2461 = vrcp.pop %v2426
  %v2462 = vrcp.pop %v2428
  %v2463 = vrcp.pop %v2430
  %v2464 = vrcp.pop %v2432
  %v2465 = vmul.f32 %v2306, %v2433
  %v2466 = vmul.f32 %v2308, %v2434
  %v2467 = vmul.f32 %v2310, %v2435
  %v2468 = vmul.f32 %v2312, %v2436
  %v2469 = vmul.f32 %v2314, %v2437
  %v2470 = vmul.f32 %v2316, %v2438
  %v2471 = vmul.f32 %v2318, %v2439
  %v2472 = vmul.f32 %v2320, %v2440
  %v2473 = vmul.f32 %v2322, %v2441
  %v2474 = vmul.f32 %v2324, %v2442
  %v2475 = vmul.f32 %v2326, %v2443
  %v2476 = vmul.f32 %v2328, %v2444
  %v2477 = vmul.f32 %v2330, %v2445
  %v2478 = vmul.f32 %v2332, %v2446
  %v2479 = vmul.f32 %v2334, %v2447
  %v2480 = vmul.f32 %v2336, %v2448
  %v2481 = vmul.f32 %v2338, %v2449
  %v2482 = vmul.f32 %v2340, %v2450
  %v2483 = vmul.f32 %v2342, %v2451
  %v2484 = vmul.f32 %v2344, %v2452
  %v2485 = vmul.f32 %v2346, %v2453
  %v2486 = vmul.f32 %v2348, %v2454
  %v2487 = vmul.f32 %v2350, %v2455
  %v2488 = vmul.f32 %v2352, %v2456
  %v2489 = vmul.f32 %v2354, %v2457
  %v2490 = vmul.f32 %v2356, %v2458
  %v2491 = vmul.f32 %v2358, %v2459
  %v2492 = vmul.f32 %v2360, %v2460
  %v2493 = vmul.f32 %v2362, %v2461
  %v2494 = vmul.f32 %v2364, %v2462
  %v2495 = vmul.f32 %v2366, %v2463
  %v2496 = vmul.f32 %v2368, %v2464
  %2497 = vst.msk [vmem:[%s11] sm:$0xff] %vm101, %v2465
  %2498 = vst.msk [vmem:[%s11 + $0x8] sm:$0xff] %vm101, %v2466
  %2499 = vst.msk [vmem:[%s11 + $0x10] sm:$0xff] %vm101, %v2467
  %2500 = vst.msk [vmem:[%s11 + $0x18] sm:$0xff] %vm101, %v2468
  %2501 = vst.msk [vmem:[%s11 + $0x20] sm:$0xff] %vm101, %v2469
  %2502 = vst.msk [vmem:[%s11 + $0x28] sm:$0xff] %vm101, %v2470
  %2503 = vst.msk [vmem:[%s11 + $0x30] sm:$0xff] %vm101, %v2471
  %2504 = vst.msk [vmem:[%s11 + $0x38] sm:$0xff] %vm101, %v2472
  %2505 = vst.msk [vmem:[%s11 + $0x40] sm:$0xff] %vm101, %v2473
  %2506 = vst.msk [vmem:[%s11 + $0x48] sm:$0xff] %vm101, %v2474
  %2507 = vst.msk [vmem:[%s11 + $0x50] sm:$0xff] %vm101, %v2475
  %2508 = vst.msk [vmem:[%s11 + $0x58] sm:$0xff] %vm101, %v2476
  %2509 = vst.msk [vmem:[%s11 + $0x60] sm:$0xff] %vm101, %v2477
  %2510 = vst.msk [vmem:[%s11 + $0x68] sm:$0xff] %vm101, %v2478
  %2511 = vst.msk [vmem:[%s11 + $0x70] sm:$0xff] %vm101, %v2479
  %2512 = vst.msk [vmem:[%s11 + $0x78] sm:$0xff] %vm101, %v2480
  %2513 = vst.msk [vmem:[%s11 + $0x80] sm:$0xff] %vm101, %v2481
  %2514 = vst.msk [vmem:[%s11 + $0x88] sm:$0xff] %vm101, %v2482
  %2515 = vst.msk [vmem:[%s11 + $0x90] sm:$0xff] %vm101, %v2483
  %2516 = vst.msk [vmem:[%s11 + $0x98] sm:$0xff] %vm101, %v2484
  %2517 = vst.msk [vmem:[%s11 + $0xa0] sm:$0xff] %vm101, %v2485
  %2518 = vst.msk [vmem:[%s11 + $0xa8] sm:$0xff] %vm101, %v2486
  %2519 = vst.msk [vmem:[%s11 + $0xb0] sm:$0xff] %vm101, %v2487
  %2520 = vst.msk [vmem:[%s11 + $0xb8] sm:$0xff] %vm101, %v2488
  %2521 = vst.msk [vmem:[%s11 + $0xc0] sm:$0xff] %vm101, %v2489
  %2522 = vst.msk [vmem:[%s11 + $0xc8] sm:$0xff] %vm101, %v2490
  %2523 = vst.msk [vmem:[%s11 + $0xd0] sm:$0xff] %vm101, %v2491
  %2524 = vst.msk [vmem:[%s11 + $0xd8] sm:$0xff] %vm101, %v2492
  %2525 = vst.msk [vmem:[%s11 + $0xe0] sm:$0xff] %vm101, %v2493
  %2526 = vst.msk [vmem:[%s11 + $0xe8] sm:$0xff] %vm101, %v2494
  %2527 = vst.msk [vmem:[%s11 + $0xf0] sm:$0xff] %vm101, %v2495
  %2528 = vst.msk [vmem:[%s11 + $0xf8] sm:$0xff] %vm101, %v2496
  // Predicated region
  $region46: #{neuro_forward.1} parent=0 // pred_check
    _
  $region47: #{neuro_forward.1} parent=0 // pred_check_branch
    %2530 = sbr.rel (0) target = $region49
  $region48: #{neuro_forward.1} parent=0 // pred_region
    _
  $region49: #{neuro_forward.1} parent=0 // pred_fallthru
    _
  // Predicated region
  $region50: #{neuro_forward.1} parent=0 // pred_check
    _
  $region51: #{neuro_forward.1} parent=0 // pred_check_branch
    %2532 = sbr.rel (0) target = $region53
  $region52: #{neuro_forward.1} parent=0 // pred_region
    _
  $region53: #{neuro_forward.1} parent=0 // pred_fallthru
    _

</llo_original>
